<compile_context>
chip_gen: v5e
topology: v5e:2x2
jax: 0.10.0
libtpu: 0.0.40
codegen_flags: <defaults>
</compile_context>

<pallas_src>
import jax
import jax.numpy as jnp
from jax.experimental import pallas as pl
from jax.experimental.pallas import tpu as pltpu


def _round_up(x, m):
    return ((x + m - 1) // m) * m


def _choose_tile_b(batch):
    # One big step for small/medium batches (v5e/v6e single TC: fewest grid
    # steps wins).  Two steps for up to ~8K rows so v7x's second TensorCore
    # gets work via the "parallel" grid axis.  2048-row tiles beyond that.
    if batch <= 1024:
        return _round_up(batch, 8)
    if batch <= 8192:
        return _round_up(pl.cdiv(batch, 2), 8)
    return 2048


def _encoder_kernel(bounds_ref, x_ref, w1_ref, b1_ref, w2_ref, b2_ref,
                    w3_ref, b3_ref, o_ref):
    lat_lb = bounds_ref[0]
    scale = bounds_ref[1] - bounds_ref[0]          # hoisted (lat_ub - lat_lb)

    x = x_ref[...]                                  # f32 [tb, input_dim]

    # Linear(in, 128) + ReLU
    h1 = jnp.dot(x, w1_ref[...], preferred_element_type=jnp.float32)
    h1 = jnp.maximum(h1 + b1_ref[...], 0.0)         # f32 [tb, 128]

    # Linear(128, 64) + ReLU   (no padding of the 64-wide hidden layer)
    h2 = jnp.dot(h1, w2_ref[...], preferred_element_type=jnp.float32)
    h2 = jnp.maximum(h2 + b2_ref[...], 0.0)         # f32 [tb, 64]

    # Linear(64, latent)
    z = jnp.dot(h2, w3_ref[...], preferred_element_type=jnp.float32) \
        + b3_ref[...]                               # f32 [tb, latent]

    # lat_lb + (lat_ub - lat_lb) * sigmoid(z)
    o_ref[...] = (lat_lb + scale * jax.nn.sigmoid(z)).astype(o_ref.dtype)


def encoder_forward(x, params, *, lat_lb=0.0, lat_ub=1.0, tile_b=None):
    """x: [B, input_dim] float32.  params: dict of w1,b1,w2,b2,w3,b3 with
    weights stored [in_features, out_features] (x @ W + b)."""
    B, input_dim = x.shape
    w1, b1 = params["w1"], params["b1"]      # [in,128],  [1,128]
    w2, b2 = params["w2"], params["b2"]      # [128,64],  [1,64]
    w3, b3 = params["w3"], params["b3"]      # [64,lat],  [1,lat]
    h1_dim = w1.shape[1]
    h2_dim = w2.shape[1]
    latent_dim = w3.shape[1]

    if tile_b is None:
        tile_b = _choose_tile_b(B)
    grid = (pl.cdiv(B, tile_b),)             # ragged last block is handled

    bounds = jnp.asarray([lat_lb, lat_ub], dtype=jnp.float32)

    flops = 2 * B * (input_dim * h1_dim + h1_dim * h2_dim + h2_dim * latent_dim)
    weight_bytes = 4 * (w1.size + b1.size + w2.size + b2.size + w3.size + b3.size)
    bytes_accessed = 4 * x.size + 4 * B * latent_dim + weight_bytes
    cost = pl.CostEstimate(flops=flops,
                           transcendentals=B * latent_dim,     # sigmoid exp
                           bytes_accessed=bytes_accessed)

    out = pl.pallas_call(
        _encoder_kernel,
        out_shape=jax.ShapeDtypeStruct((B, latent_dim), jnp.float32),
        grid_spec=pltpu.PrefetchScalarGridSpec(
            num_scalar_prefetch=0,
            grid=grid,
            in_specs=[
                # lat_lb / lat_ub in SMEM (no recompile when bounds change)
                pl.BlockSpec(memory_space=pltpu.MemorySpace.SMEM),
                # x: tiled over the batch axis, full (small) feature dim
                pl.BlockSpec((tile_b, input_dim), lambda i: (i, 0)),
                # weights / biases: resident, same block for every grid step
                pl.BlockSpec((input_dim, h1_dim), lambda i: (0, 0)),
                pl.BlockSpec((1, h1_dim), lambda i: (0, 0)),
                pl.BlockSpec((h1_dim, h2_dim), lambda i: (0, 0)),
                pl.BlockSpec((1, h2_dim), lambda i: (0, 0)),
                pl.BlockSpec((h2_dim, latent_dim), lambda i: (0, 0)),
                pl.BlockSpec((1, latent_dim), lambda i: (0, 0)),
            ],
            out_specs=pl.BlockSpec((tile_b, latent_dim), lambda i: (i, 0)),
        ),
        compiler_params=pltpu.CompilerParams(
            dimension_semantics=("parallel",)),
        cost_estimate=cost,
    )(bounds, x, w1, b1, w2, b2, w3, b3)

    return out


def init_params(key, input_dim, latent_dim):
    """Deterministic synthetic parameters matching the torch module's shapes."""
    ks = jax.random.split(key, 6)

    def lin(kw, kb, fan_in, fan_out):
        # torch default init: U(-1/sqrt(fan_in), 1/sqrt(fan_in))
        bound = 1.0 / jnp.sqrt(fan_in)
        w = jax.random.uniform(kw, (fan_in, fan_out), jnp.float32, -bound, bound)
        b = jax.random.uniform(kb, (1, fan_out), jnp.float32, -bound, bound)
        return w, b

    w1, b1 = lin(ks[0], ks[1], input_dim, 128)
    w2, b2 = lin(ks[2], ks[3], 128, 64)
    w3, b3 = lin(ks[4], ks[5], 64, latent_dim)
    return dict(w1=w1, b1=b1, w2=w2, b2=b2, w3=w3, b3=b3)


def encoder_reference_f32(x, params, lat_lb=0.0, lat_ub=1.0):
    """Pure-f32 JAX reference (matches the torch module exactly)."""
    h1 = jax.nn.relu(x @ params["w1"] + params["b1"])
    h2 = jax.nn.relu(h1 @ params["w2"] + params["b2"])
    z = h2 @ params["w3"] + params["b3"]
    return lat_lb + (lat_ub - lat_lb) * jax.nn.sigmoid(z)


if __name__ == "__main__":
    input_dim, latent_dim = 32, 4
    batch = 512                 # single grid step (tile_b = 512)
    lat_lb, lat_ub = -2.0, 3.0

    key = jax.random.PRNGKey(0)
    kx, kp = jax.random.split(key)
    x = jax.random.normal(kx, (batch, input_dim), jnp.float32)
    params = init_params(kp, input_dim, latent_dim)

    out = encoder_forward(x, params, lat_lb=lat_lb, lat_ub=lat_ub)
    out = jax.block_until_ready(out)
    assert out.shape == (batch, latent_dim)

    # Exact f32 semantics -> tight tolerance against the torch-equivalent ref.
    ref = encoder_reference_f32(x, params, lat_lb, lat_ub)
    assert jnp.allclose(out, ref, atol=1e-4, rtol=1e-4), \
        "mismatch vs f32 JAX reference"

    print("KERNEL_OK")
</pallas_src>

<mosaic_0001>
module attributes {stable_mosaic.version = 11 : i64} {
  func.func @_encoder_kernel(%arg0: i32, %arg1: memref<2xf32, #tpu.memory_space<smem>>, %arg2: memref<512x32xf32, #tpu.memory_space<vmem>>, %arg3: memref<32x128xf32, #tpu.memory_space<vmem>>, %arg4: memref<1x128xf32, #tpu.memory_space<vmem>>, %arg5: memref<128x64xf32, #tpu.memory_space<vmem>>, %arg6: memref<1x64xf32, #tpu.memory_space<vmem>>, %arg7: memref<64x4xf32, #tpu.memory_space<vmem>>, %arg8: memref<1x4xf32, #tpu.memory_space<vmem>>, %arg9: memref<512x4xf32, #tpu.memory_space<vmem>>) attributes {dimension_semantics = [#tpu.dimension_semantics<parallel>], iteration_bounds = array<i64: 1>, scalar_prefetch = 0 : i64, scratch_operands = 0 : i64, tpu.core_type = #tpu.core_type<tc>, window_params = [{transform_indices = @transform_0, window_bounds = array<i64: 2>}, {transform_indices = @transform_1, window_bounds = array<i64: 512, 32>}, {pipeline_mode = #tpu.pipeline_mode<synchronous>, transform_indices = @transform_2, window_bounds = array<i64: 32, 128>}, {pipeline_mode = #tpu.pipeline_mode<synchronous>, transform_indices = @transform_3, window_bounds = array<i64: 1, 128>}, {pipeline_mode = #tpu.pipeline_mode<synchronous>, transform_indices = @transform_4, window_bounds = array<i64: 128, 64>}, {pipeline_mode = #tpu.pipeline_mode<synchronous>, transform_indices = @transform_5, window_bounds = array<i64: 1, 64>}, {pipeline_mode = #tpu.pipeline_mode<synchronous>, transform_indices = @transform_6, window_bounds = array<i64: 64, 4>}, {pipeline_mode = #tpu.pipeline_mode<synchronous>, transform_indices = @transform_7, window_bounds = array<i64: 1, 4>}, {transform_indices = @transform_8, window_bounds = array<i64: 512, 4>}]} {
    %c0 = arith.constant 0 : index
    %0 = memref.load %arg1[%c0] : memref<2xf32, #tpu.memory_space<smem>>
    %c1 = arith.constant 1 : index
    %1 = memref.load %arg1[%c1] : memref<2xf32, #tpu.memory_space<smem>>
    %c0_0 = arith.constant 0 : index
    %2 = memref.load %arg1[%c0_0] : memref<2xf32, #tpu.memory_space<smem>>
    %3 = arith.subf %1, %2 : f32
    %c0_1 = arith.constant 0 : index
    %c0_2 = arith.constant 0 : index
    %4 = vector.load %arg2[%c0_1, %c0_2] : memref<512x32xf32, #tpu.memory_space<vmem>>, vector<512x32xf32>
    %c0_3 = arith.constant 0 : index
    %c0_4 = arith.constant 0 : index
    %5 = vector.load %arg3[%c0_3, %c0_4] : memref<32x128xf32, #tpu.memory_space<vmem>>, vector<32x128xf32>
    %cst = arith.constant dense<0.000000e+00> : vector<512x128xf32>
    %6 = tpu.matmul %4, %5, %cst {dimension_numbers = #tpu.dot_dimension_numbers<[1], [0], [0], [1], [0, 0, 1, 1], [], []>} : vector<512x32xf32>, vector<32x128xf32>, vector<512x128xf32> -> vector<512x128xf32>
    %c0_5 = arith.constant 0 : index
    %c0_6 = arith.constant 0 : index
    %7 = vector.load %arg4[%c0_5, %c0_6] : memref<1x128xf32, #tpu.memory_space<vmem>>, vector<1x128xf32>
    %8 = vector.broadcast %7 : vector<1x128xf32> to vector<512x128xf32>
    %9 = arith.addf %6, %8 : vector<512x128xf32>
    %cst_7 = arith.constant 0.000000e+00 : f32
    %10 = vector.broadcast %cst_7 : f32 to vector<512x128xf32>
    %11 = arith.maximumf %9, %10 : vector<512x128xf32>
    %c0_8 = arith.constant 0 : index
    %c0_9 = arith.constant 0 : index
    %12 = vector.load %arg5[%c0_8, %c0_9] : memref<128x64xf32, #tpu.memory_space<vmem>>, vector<128x64xf32>
    %cst_10 = arith.constant dense<0.000000e+00> : vector<512x64xf32>
    %13 = tpu.matmul %11, %12, %cst_10 {dimension_numbers = #tpu.dot_dimension_numbers<[1], [0], [0], [1], [0, 0, 1, 1], [], []>} : vector<512x128xf32>, vector<128x64xf32>, vector<512x64xf32> -> vector<512x64xf32>
    %c0_11 = arith.constant 0 : index
    %c0_12 = arith.constant 0 : index
    %14 = vector.load %arg6[%c0_11, %c0_12] : memref<1x64xf32, #tpu.memory_space<vmem>>, vector<1x64xf32>
    %15 = vector.broadcast %14 : vector<1x64xf32> to vector<512x64xf32>
    %16 = arith.addf %13, %15 : vector<512x64xf32>
    %cst_13 = arith.constant 0.000000e+00 : f32
    %17 = vector.broadcast %cst_13 : f32 to vector<512x64xf32>
    %18 = arith.maximumf %16, %17 : vector<512x64xf32>
    %c0_14 = arith.constant 0 : index
    %c0_15 = arith.constant 0 : index
    %19 = vector.load %arg7[%c0_14, %c0_15] : memref<64x4xf32, #tpu.memory_space<vmem>>, vector<64x4xf32>
    %cst_16 = arith.constant dense<0.000000e+00> : vector<512x4xf32>
    %20 = tpu.matmul %18, %19, %cst_16 {dimension_numbers = #tpu.dot_dimension_numbers<[1], [0], [0], [1], [0, 0, 1, 1], [], []>} : vector<512x64xf32>, vector<64x4xf32>, vector<512x4xf32> -> vector<512x4xf32>
    %c0_17 = arith.constant 0 : index
    %c0_18 = arith.constant 0 : index
    %21 = vector.load %arg8[%c0_17, %c0_18] : memref<1x4xf32, #tpu.memory_space<vmem>>, vector<1x4xf32>
    %22 = vector.broadcast %21 : vector<1x4xf32> to vector<512x4xf32>
    %23 = arith.addf %20, %22 : vector<512x4xf32>
    %24 = arith.negf %23 : vector<512x4xf32>
    %25 = math.exp %24 : vector<512x4xf32>
    %cst_19 = arith.constant 1.000000e+00 : f32
    %26 = vector.broadcast %cst_19 : f32 to vector<512x4xf32>
    %27 = arith.addf %26, %25 : vector<512x4xf32>
    %28 = arith.divf %26, %27 : vector<512x4xf32>
    %29 = vector.broadcast %3 : f32 to vector<512x4xf32>
    %30 = arith.mulf %29, %28 : vector<512x4xf32>
    %31 = vector.broadcast %0 : f32 to vector<512x4xf32>
    %32 = arith.addf %31, %30 : vector<512x4xf32>
    %c0_20 = arith.constant 0 : index
    %c0_21 = arith.constant 0 : index
    %33 = vector.load %arg9[%c0_20, %c0_21] : memref<512x4xf32, #tpu.memory_space<vmem>>, vector<512x4xf32>
    tpu.vector_store %arg9[%c0_20, %c0_21], %32 {strides = array<i32>} : memref<512x4xf32, #tpu.memory_space<vmem>>, vector<512x4xf32>,
    return
  }
  func.func @transform_0(%arg0: i32) -> i32 {
    %c0_i32 = arith.constant 0 : i32
    %c0_i32_0 = arith.constant 0 : i32
    return %c0_i32 : i32
  }
  func.func @transform_1(%arg0: i32) -> (i32, i32) {
    %c0_i32 = arith.constant 0 : i32
    %c0_i32_0 = arith.constant 0 : i32
    return %arg0, %c0_i32 : i32, i32
  }
  func.func @transform_2(%arg0: i32) -> (i32, i32) {
    %c0_i32 = arith.constant 0 : i32
    %c0_i32_0 = arith.constant 0 : i32
    %c0_i32_1 = arith.constant 0 : i32
    return %c0_i32, %c0_i32_0 : i32, i32
  }
  func.func @transform_3(%arg0: i32) -> (i32, i32) {
    %c0_i32 = arith.constant 0 : i32
    %c0_i32_0 = arith.constant 0 : i32
    %c0_i32_1 = arith.constant 0 : i32
    return %c0_i32, %c0_i32_0 : i32, i32
  }
  func.func @transform_4(%arg0: i32) -> (i32, i32) {
    %c0_i32 = arith.constant 0 : i32
    %c0_i32_0 = arith.constant 0 : i32
    %c0_i32_1 = arith.constant 0 : i32
    return %c0_i32, %c0_i32_0 : i32, i32
  }
  func.func @transform_5(%arg0: i32) -> (i32, i32) {
    %c0_i32 = arith.constant 0 : i32
    %c0_i32_0 = arith.constant 0 : i32
    %c0_i32_1 = arith.constant 0 : i32
    return %c0_i32, %c0_i32_0 : i32, i32
  }
  func.func @transform_6(%arg0: i32) -> (i32, i32) {
    %c0_i32 = arith.constant 0 : i32
    %c0_i32_0 = arith.constant 0 : i32
    %c0_i32_1 = arith.constant 0 : i32
    return %c0_i32, %c0_i32_0 : i32, i32
  }
  func.func @transform_7(%arg0: i32) -> (i32, i32) {
    %c0_i32 = arith.constant 0 : i32
    %c0_i32_0 = arith.constant 0 : i32
    %c0_i32_1 = arith.constant 0 : i32
    return %c0_i32, %c0_i32_0 : i32, i32
  }
  func.func @transform_8(%arg0: i32) -> (i32, i32) {
    %c0_i32 = arith.constant 0 : i32
    %c0_i32_0 = arith.constant 0 : i32
    return %arg0, %c0_i32 : i32, i32
  }
}

</mosaic_0001>

<llo_original>
// kernel: tpu_custom_call.1
$region0: #{tpu_custom_call.1}
  #allocation0 [shape = 'u32[]', space=smem, size = 0x4, offset = 0x4, fixed_abs, tag = 'smem constant byte address 0x4 - core index']
  #allocation1 [shape = 'u32[72,128]{1,0:T(1,128)}', space=vmem, size = 0x9000, scoped, tag = 'internal scratch']
  %s0 = inlined_call_operand.vmem [shape: f32[2], index: 0, kind: input, shape index: {}]
  %s1 = inlined_call_operand.vmem [shape: f32[512,32], index: 1, kind: input, shape index: {}]
  %s2 = inlined_call_operand.vmem [shape: f32[32,128], index: 2, kind: input, shape index: {}]
  %s3 = inlined_call_operand.vmem [shape: f32[1,128], index: 3, kind: input, shape index: {}]
  %s4 = inlined_call_operand.vmem [shape: f32[128,64], index: 4, kind: input, shape index: {}]
  %s5 = inlined_call_operand.vmem [shape: f32[1,64], index: 5, kind: input, shape index: {}]
  %s6 = inlined_call_operand.vmem [shape: f32[64,4], index: 6, kind: input, shape index: {}]
  %s7 = inlined_call_operand.vmem [shape: f32[1,4], index: 7, kind: input, shape index: {}]
  %s8 = inlined_call_operand.vmem [shape: f32[512,4], index: 8, kind: output, shape index: {}]
  %s9 = sld [smem:[#allocation0]]
  $region46: #{tpu_custom_call.1} parent=0
    _
  %s11 = ssub.s32 1, %s9
  %s12 = scalar_select 0, %s11, %s9
  $region1: #{tpu_custom_call.1} parent=0
    #allocation2 [shape = 'u8[512]{0}', space=smem, size = 0x200, scoped, tag = 'input window, operand 0, single buffered']
    #allocation3 [shape = 's32[1]{0}', space=sflag, size = 0x4, scoped, tag = 'scoped memory for tpu_custom_call.1']
    %13 = vsyncpa [#allocation3], 0
    // Predicated region
    $region2: #{tpu_custom_call.1} parent=1 // pred_check
      _
    $region3: #{tpu_custom_call.1} parent=1 // pred_check_branch
      %15 = sbr.rel (0) target = $region5
    $region4: #{tpu_custom_call.1} parent=1 // pred_region
      %17 = vsyncadd [#allocation3], 0
      %s19 = sshll.u32 %s0, 4
      %s20 = int_to_ptr.vmem [resolvable:$true] %s19
      %22 = dma.vmem_to_smem %s20, 16, [#allocation2], [#allocation3]
    $region5: #{tpu_custom_call.1} parent=1 // pred_fallthru
      _
    // Predicated region
    $region6: #{tpu_custom_call.1} parent=1 // pred_check
      _
    $region7: #{tpu_custom_call.1} parent=1 // pred_check_branch
      %24 = sbr.rel (0) target = $region9
    $region8: #{tpu_custom_call.1} parent=1 // pred_region
      _
    $region9: #{tpu_custom_call.1} parent=1 // pred_fallthru
      _
    // Predicated region
    $region10: #{tpu_custom_call.1} parent=1 // pred_check
      _
    $region11: #{tpu_custom_call.1} parent=1 // pred_check_branch
      %26 = sbr.rel (0) target = $region13
    $region12: #{tpu_custom_call.1} parent=1 // pred_region
      _
    $region13: #{tpu_custom_call.1} parent=1 // pred_fallthru
      _
    // Predicated region
    $region14: #{tpu_custom_call.1} parent=1 // pred_check
      _
    $region15: #{tpu_custom_call.1} parent=1 // pred_check_branch
      %28 = sbr.rel (0) target = $region17
    $region16: #{tpu_custom_call.1} parent=1 // pred_region
      _
    $region17: #{tpu_custom_call.1} parent=1 // pred_fallthru
      _
    // Predicated region
    $region18: #{tpu_custom_call.1} parent=1 // pred_check
      _
    $region19: #{tpu_custom_call.1} parent=1 // pred_check_branch
      %30 = sbr.rel (0) target = $region21
    $region20: #{tpu_custom_call.1} parent=1 // pred_region
      _
    $region21: #{tpu_custom_call.1} parent=1 // pred_fallthru
      _
    // Predicated region
    $region22: #{tpu_custom_call.1} parent=1 // pred_check
      _
    $region23: #{tpu_custom_call.1} parent=1 // pred_check_branch
      %32 = sbr.rel (0) target = $region25
    $region24: #{tpu_custom_call.1} parent=1 // pred_region
      _
    $region25: #{tpu_custom_call.1} parent=1 // pred_fallthru
      _
    // Predicated region
    $region26: #{tpu_custom_call.1} parent=1 // pred_check
      _
    $region27: #{tpu_custom_call.1} parent=1 // pred_check_branch
      %34 = sbr.rel (0) target = $region29
    $region28: #{tpu_custom_call.1} parent=1 // pred_region
      _
    $region29: #{tpu_custom_call.1} parent=1 // pred_fallthru
      _
    // Predicated region
    $region30: #{tpu_custom_call.1} parent=1 // pred_check
      _
    $region31: #{tpu_custom_call.1} parent=1 // pred_check_branch
      %36 = sbr.rel (0) target = $region33
    $region32: #{tpu_custom_call.1} parent=1 // pred_region
      _
    $region33: #{tpu_custom_call.1} parent=1 // pred_fallthru
      _
    // Predicated region
    $region34: #{tpu_custom_call.1} parent=1 // pred_check
      _
    $region35: #{tpu_custom_call.1} parent=1 // pred_check_branch
      %38 = sbr.rel (0) target = $region37
    $region36: #{tpu_custom_call.1} parent=1 // pred_region
      %40 = dma.done [#allocation3], 16
    $region37: #{tpu_custom_call.1} parent=1 // pred_fallthru
      _
    %41 = sfence
    %s42 = sld [smem:[#allocation2]]
    %s43 = sld [smem:[#allocation2 + $0x1]]
    %s44 = ssub.f32 %s43, %s42
    %v45 = vld [vmem:[%s1] sm:$0xff]
    %v46 = vld [vmem:[%s1 + $0x8] sm:$0xff]
    %v47 = vld [vmem:[%s1 + $0x10] sm:$0xff]
    %v48 = vld [vmem:[%s1 + $0x18] sm:$0xff]
    %v49 = vld [vmem:[%s1 + $0x20] sm:$0xff]
    %v50 = vld [vmem:[%s1 + $0x28] sm:$0xff]
    %v51 = vld [vmem:[%s1 + $0x30] sm:$0xff]
    %v52 = vld [vmem:[%s1 + $0x38] sm:$0xff]
    %v53 = vld [vmem:[%s1 + $0x40] sm:$0xff]
    %v54 = vld [vmem:[%s1 + $0x48] sm:$0xff]
    %v55 = vld [vmem:[%s1 + $0x50] sm:$0xff]
    %v56 = vld [vmem:[%s1 + $0x58] sm:$0xff]
    %v57 = vld [vmem:[%s1 + $0x60] sm:$0xff]
    %v58 = vld [vmem:[%s1 + $0x68] sm:$0xff]
    %v59 = vld [vmem:[%s1 + $0x70] sm:$0xff]
    %v60 = vld [vmem:[%s1 + $0x78] sm:$0xff]
    %v61 = vld [vmem:[%s1 + $0x80] sm:$0xff]
    %v62 = vld [vmem:[%s1 + $0x88] sm:$0xff]
    %v63 = vld [vmem:[%s1 + $0x90] sm:$0xff]
    %v64 = vld [vmem:[%s1 + $0x98] sm:$0xff]
    %v65 = vld [vmem:[%s1 + $0xa0] sm:$0xff]
    %v66 = vld [vmem:[%s1 + $0xa8] sm:$0xff]
    %v67 = vld [vmem:[%s1 + $0xb0] sm:$0xff]
    %v68 = vld [vmem:[%s1 + $0xb8] sm:$0xff]
    %v69 = vld [vmem:[%s1 + $0xc0] sm:$0xff]
    %v70 = vld [vmem:[%s1 + $0xc8] sm:$0xff]
    %v71 = vld [vmem:[%s1 + $0xd0] sm:$0xff]
    %v72 = vld [vmem:[%s1 + $0xd8] sm:$0xff]
    %v73 = vld [vmem:[%s1 + $0xe0] sm:$0xff]
    %v74 = vld [vmem:[%s1 + $0xe8] sm:$0xff]
    %v75 = vld [vmem:[%s1 + $0xf0] sm:$0xff]
    %v76 = vld [vmem:[%s1 + $0xf8] sm:$0xff]
    %v77 = vld [vmem:[%s1 + $0x100] sm:$0xff]
    %v78 = vld [vmem:[%s1 + $0x108] sm:$0xff]
    %v79 = vld [vmem:[%s1 + $0x110] sm:$0xff]
    %v80 = vld [vmem:[%s1 + $0x118] sm:$0xff]
    %v81 = vld [vmem:[%s1 + $0x120] sm:$0xff]
    %v82 = vld [vmem:[%s1 + $0x128] sm:$0xff]
    %v83 = vld [vmem:[%s1 + $0x130] sm:$0xff]
    %v84 = vld [vmem:[%s1 + $0x138] sm:$0xff]
    %v85 = vld [vmem:[%s1 + $0x140] sm:$0xff]
    %v86 = vld [vmem:[%s1 + $0x148] sm:$0xff]
    %v87 = vld [vmem:[%s1 + $0x150] sm:$0xff]
    %v88 = vld [vmem:[%s1 + $0x158] sm:$0xff]
    %v89 = vld [vmem:[%s1 + $0x160] sm:$0xff]
    %v90 = vld [vmem:[%s1 + $0x168] sm:$0xff]
    %v91 = vld [vmem:[%s1 + $0x170] sm:$0xff]
    %v92 = vld [vmem:[%s1 + $0x178] sm:$0xff]
    %v93 = vld [vmem:[%s1 + $0x180] sm:$0xff]
    %v94 = vld [vmem:[%s1 + $0x188] sm:$0xff]
    %v95 = vld [vmem:[%s1 + $0x190] sm:$0xff]
    %v96 = vld [vmem:[%s1 + $0x198] sm:$0xff]
    %v97 = vld [vmem:[%s1 + $0x1a0] sm:$0xff]
    %v98 = vld [vmem:[%s1 + $0x1a8] sm:$0xff]
    %v99 = vld [vmem:[%s1 + $0x1b0] sm:$0xff]
    %v100 = vld [vmem:[%s1 + $0x1b8] sm:$0xff]
    %v101 = vld [vmem:[%s1 + $0x1c0] sm:$0xff]
    %v102 = vld [vmem:[%s1 + $0x1c8] sm:$0xff]
    %v103 = vld [vmem:[%s1 + $0x1d0] sm:$0xff]
    %v104 = vld [vmem:[%s1 + $0x1d8] sm:$0xff]
    %v105 = vld [vmem:[%s1 + $0x1e0] sm:$0xff]
    %v106 = vld [vmem:[%s1 + $0x1e8] sm:$0xff]
    %v107 = vld [vmem:[%s1 + $0x1f0] sm:$0xff]
    %v108 = vld [vmem:[%s1 + $0x1f8] sm:$0xff]
    %v109 = vld [vmem:[%s2] sm:$0xff]
    %v110 = vld [vmem:[%s2 + $0x8] sm:$0xff]
    %v111 = vld [vmem:[%s2 + $0x10] sm:$0xff]
    %v112 = vld [vmem:[%s2 + $0x18] sm:$0xff]
    %v113 = vld [vmem:[%s3] sm:$0x1]
    %v115 = vperm.slane %v113, 0
    %vm117 = vcmask 261120
    %v119 = vsel %vm117, %v45, 0
    %v122 = vsel %vm117, %v46, 0
    %v125 = vsel %vm117, %v47, 0
    %v128 = vsel %vm117, %v48, 0
    %v131 = vsel %vm117, %v49, 0
    %v134 = vsel %vm117, %v50, 0
    %v137 = vsel %vm117, %v51, 0
    %v140 = vsel %vm117, %v52, 0
    %v143 = vsel %vm117, %v53, 0
    %v146 = vsel %vm117, %v54, 0
    %v149 = vsel %vm117, %v55, 0
    %v152 = vsel %vm117, %v56, 0
    %v155 = vsel %vm117, %v57, 0
    %v158 = vsel %vm117, %v58, 0
    %v161 = vsel %vm117, %v59, 0
    %v164 = vsel %vm117, %v60, 0
    %v167 = vsel %vm117, %v61, 0
    %v170 = vsel %vm117, %v62, 0
    %v173 = vsel %vm117, %v63, 0
    %v176 = vsel %vm117, %v64, 0
    %v179 = vsel %vm117, %v65, 0
    %v182 = vsel %vm117, %v66, 0
    %v185 = vsel %vm117, %v67, 0
    %v188 = vsel %vm117, %v68, 0
    %v191 = vsel %vm117, %v69, 0
    %v194 = vsel %vm117, %v70, 0
    %v197 = vsel %vm117, %v71, 0
    %v200 = vsel %vm117, %v72, 0
    %v203 = vsel %vm117, %v73, 0
    %v206 = vsel %vm117, %v74, 0
    %v209 = vsel %vm117, %v75, 0
    %v212 = vsel %vm117, %v76, 0
    %v215 = vsel %vm117, %v77, 0
    %v218 = vsel %vm117, %v78, 0
    %v221 = vsel %vm117, %v79, 0
    %v224 = vsel %vm117, %v80, 0
    %v227 = vsel %vm117, %v81, 0
    %v230 = vsel %vm117, %v82, 0
    %v233 = vsel %vm117, %v83, 0
    %v236 = vsel %vm117, %v84, 0
    %v239 = vsel %vm117, %v85, 0
    %v242 = vsel %vm117, %v86, 0
    %v245 = vsel %vm117, %v87, 0
    %v248 = vsel %vm117, %v88, 0
    %v251 = vsel %vm117, %v89, 0
    %v254 = vsel %vm117, %v90, 0
    %v257 = vsel %vm117, %v91, 0
    %v260 = vsel %vm117, %v92, 0
    %v263 = vsel %vm117, %v93, 0
    %v266 = vsel %vm117, %v94, 0
    %v269 = vsel %vm117, %v95, 0
    %v272 = vsel %vm117, %v96, 0
    %v275 = vsel %vm117, %v97, 0
    %v278 = vsel %vm117, %v98, 0
    %v281 = vsel %vm117, %v99, 0
    %v284 = vsel %vm117, %v100, 0
    %v287 = vsel %vm117, %v101, 0
    %v290 = vsel %vm117, %v102, 0
    %v293 = vsel %vm117, %v103, 0
    %v296 = vsel %vm117, %v104, 0
    %v299 = vsel %vm117, %v105, 0
    %v302 = vsel %vm117, %v106, 0
    %v305 = vsel %vm117, %v107, 0
    %v308 = vsel %vm117, %v108, 0
    %310 = vmatpush.msra.mxu0 0.0
    %311 = vmatpush.msra.mxu0 0.0
    %312 = vmatpush.msra.mxu0 0.0
    %313 = vmatpush.msra.mxu0 0.0
    %314 = vmatpush.msra.mxu0 0.0
    %315 = vmatpush.msra.mxu0 0.0
    %316 = vmatpush.msra.mxu0 0.0
    %317 = vmatpush.msra.mxu0 0.0
    %318 = vmatpush.msra.mxu0 0.0
    %319 = vmatpush.msra.mxu0 0.0
    %320 = vmatpush.msra.mxu0 0.0
    %321 = vmatpush.msra.mxu0 0.0
    %322 = vmatpush.msra.mxu0 %v112
    %323 = vmatpush.msra.mxu0 %v111
    %324 = vmatpush.msra.mxu0 %v110
    %325 = vmatpush.msra.mxu0 %v109
    %326 = vmatmul.f32.gmra.mxu0 %v119
    %v327 = vpop.f32.mrf.mxu0
    %v328 = vadd.f32 %v115, %v327
    %329 = vmatmul.f32.gmra.mxu0 %v122
    %v330 = vpop.f32.mrf.mxu0
    %v331 = vadd.f32 %v115, %v330
    %332 = vmatmul.f32.gmra.mxu0 %v125
    %v333 = vpop.f32.mrf.mxu0
    %v334 = vadd.f32 %v115, %v333
    %335 = vmatmul.f32.gmra.mxu0 %v128
    %v336 = vpop.f32.mrf.mxu0
    %v337 = vadd.f32 %v115, %v336
    %338 = vmatmul.f32.gmra.mxu0 %v131
    %v339 = vpop.f32.mrf.mxu0
    %v340 = vadd.f32 %v115, %v339
    %341 = vmatmul.f32.gmra.mxu0 %v134
    %v342 = vpop.f32.mrf.mxu0
    %v343 = vadd.f32 %v115, %v342
    %344 = vmatmul.f32.gmra.mxu0 %v137
    %v345 = vpop.f32.mrf.mxu0
    %v346 = vadd.f32 %v115, %v345
    %347 = vmatmul.f32.gmra.mxu0 %v140
    %v348 = vpop.f32.mrf.mxu0
    %v349 = vadd.f32 %v115, %v348
    %350 = vmatmul.f32.gmra.mxu0 %v143
    %v351 = vpop.f32.mrf.mxu0
    %v352 = vadd.f32 %v115, %v351
    %353 = vmatmul.f32.gmra.mxu0 %v146
    %v354 = vpop.f32.mrf.mxu0
    %v355 = vadd.f32 %v115, %v354
    %356 = vmatmul.f32.gmra.mxu0 %v149
    %v357 = vpop.f32.mrf.mxu0
    %v358 = vadd.f32 %v115, %v357
    %359 = vmatmul.f32.gmra.mxu0 %v152
    %v360 = vpop.f32.mrf.mxu0
    %v361 = vadd.f32 %v115, %v360
    %362 = vmatmul.f32.gmra.mxu0 %v155
    %v363 = vpop.f32.mrf.mxu0
    %v364 = vadd.f32 %v115, %v363
    %365 = vmatmul.f32.gmra.mxu0 %v158
    %v366 = vpop.f32.mrf.mxu0
    %v367 = vadd.f32 %v115, %v366
    %368 = vmatmul.f32.gmra.mxu0 %v161
    %v369 = vpop.f32.mrf.mxu0
    %v370 = vadd.f32 %v115, %v369
    %371 = vmatmul.f32.gmra.mxu0 %v164
    %v372 = vpop.f32.mrf.mxu0
    %v373 = vadd.f32 %v115, %v372
    %374 = vmatmul.f32.gmra.mxu0 %v167
    %v375 = vpop.f32.mrf.mxu0
    %v376 = vadd.f32 %v115, %v375
    %377 = vmatmul.f32.gmra.mxu0 %v170
    %v378 = vpop.f32.mrf.mxu0
    %v379 = vadd.f32 %v115, %v378
    %380 = vmatmul.f32.gmra.mxu0 %v173
    %v381 = vpop.f32.mrf.mxu0
    %v382 = vadd.f32 %v115, %v381
    %383 = vmatmul.f32.gmra.mxu0 %v176
    %v384 = vpop.f32.mrf.mxu0
    %v385 = vadd.f32 %v115, %v384
    %386 = vmatmul.f32.gmra.mxu0 %v179
    %v387 = vpop.f32.mrf.mxu0
    %v388 = vadd.f32 %v115, %v387
    %389 = vmatmul.f32.gmra.mxu0 %v182
    %v390 = vpop.f32.mrf.mxu0
    %v391 = vadd.f32 %v115, %v390
    %392 = vmatmul.f32.gmra.mxu0 %v185
    %v393 = vpop.f32.mrf.mxu0
    %v394 = vadd.f32 %v115, %v393
    %395 = vmatmul.f32.gmra.mxu0 %v188
    %v396 = vpop.f32.mrf.mxu0
    %v397 = vadd.f32 %v115, %v396
    %398 = vmatmul.f32.gmra.mxu0 %v191
    %v399 = vpop.f32.mrf.mxu0
    %v400 = vadd.f32 %v115, %v399
    %401 = vmatmul.f32.gmra.mxu0 %v194
    %v402 = vpop.f32.mrf.mxu0
    %v403 = vadd.f32 %v115, %v402
    %404 = vmatmul.f32.gmra.mxu0 %v197
    %v405 = vpop.f32.mrf.mxu0
    %v406 = vadd.f32 %v115, %v405
    %407 = vmatmul.f32.gmra.mxu0 %v200
    %v408 = vpop.f32.mrf.mxu0
    %v409 = vadd.f32 %v115, %v408
    %410 = vmatmul.f32.gmra.mxu0 %v203
    %v411 = vpop.f32.mrf.mxu0
    %v412 = vadd.f32 %v115, %v411
    %413 = vmatmul.f32.gmra.mxu0 %v206
    %v414 = vpop.f32.mrf.mxu0
    %v415 = vadd.f32 %v115, %v414
    %416 = vmatmul.f32.gmra.mxu0 %v209
    %v417 = vpop.f32.mrf.mxu0
    %v418 = vadd.f32 %v115, %v417
    %419 = vmatmul.f32.gmra.mxu0 %v212
    %v420 = vpop.f32.mrf.mxu0
    %v421 = vadd.f32 %v115, %v420
    %422 = vmatmul.f32.gmra.mxu0 %v215
    %v423 = vpop.f32.mrf.mxu0
    %v424 = vadd.f32 %v115, %v423
    %425 = vmatmul.f32.gmra.mxu0 %v218
    %v426 = vpop.f32.mrf.mxu0
    %v427 = vadd.f32 %v115, %v426
    %428 = vmatmul.f32.gmra.mxu0 %v221
    %v429 = vpop.f32.mrf.mxu0
    %v430 = vadd.f32 %v115, %v429
    %431 = vmatmul.f32.gmra.mxu0 %v224
    %v432 = vpop.f32.mrf.mxu0
    %v433 = vadd.f32 %v115, %v432
    %434 = vmatmul.f32.gmra.mxu0 %v227
    %v435 = vpop.f32.mrf.mxu0
    %v436 = vadd.f32 %v115, %v435
    %437 = vmatmul.f32.gmra.mxu0 %v230
    %v438 = vpop.f32.mrf.mxu0
    %v439 = vadd.f32 %v115, %v438
    %440 = vmatmul.f32.gmra.mxu0 %v233
    %v441 = vpop.f32.mrf.mxu0
    %v442 = vadd.f32 %v115, %v441
    %443 = vmatmul.f32.gmra.mxu0 %v236
    %v444 = vpop.f32.mrf.mxu0
    %v445 = vadd.f32 %v115, %v444
    %446 = vmatmul.f32.gmra.mxu0 %v239
    %v447 = vpop.f32.mrf.mxu0
    %v448 = vadd.f32 %v115, %v447
    %449 = vmatmul.f32.gmra.mxu0 %v242
    %v450 = vpop.f32.mrf.mxu0
    %v451 = vadd.f32 %v115, %v450
    %452 = vmatmul.f32.gmra.mxu0 %v245
    %v453 = vpop.f32.mrf.mxu0
    %v454 = vadd.f32 %v115, %v453
    %455 = vmatmul.f32.gmra.mxu0 %v248
    %v456 = vpop.f32.mrf.mxu0
    %v457 = vadd.f32 %v115, %v456
    %458 = vmatmul.f32.gmra.mxu0 %v251
    %v459 = vpop.f32.mrf.mxu0
    %v460 = vadd.f32 %v115, %v459
    %461 = vmatmul.f32.gmra.mxu0 %v254
    %v462 = vpop.f32.mrf.mxu0
    %v463 = vadd.f32 %v115, %v462
    %464 = vmatmul.f32.gmra.mxu0 %v257
    %v465 = vpop.f32.mrf.mxu0
    %v466 = vadd.f32 %v115, %v465
    %467 = vmatmul.f32.gmra.mxu0 %v260
    %v468 = vpop.f32.mrf.mxu0
    %v469 = vadd.f32 %v115, %v468
    %470 = vmatmul.f32.gmra.mxu0 %v263
    %v471 = vpop.f32.mrf.mxu0
    %v472 = vadd.f32 %v115, %v471
    %473 = vmatmul.f32.gmra.mxu0 %v266
    %v474 = vpop.f32.mrf.mxu0
    %v475 = vadd.f32 %v115, %v474
    %476 = vmatmul.f32.gmra.mxu0 %v269
    %v477 = vpop.f32.mrf.mxu0
    %v478 = vadd.f32 %v115, %v477
    %479 = vmatmul.f32.gmra.mxu0 %v272
    %v480 = vpop.f32.mrf.mxu0
    %v481 = vadd.f32 %v115, %v480
    %482 = vmatmul.f32.gmra.mxu0 %v275
    %v483 = vpop.f32.mrf.mxu0
    %v484 = vadd.f32 %v115, %v483
    %485 = vmatmul.f32.gmra.mxu0 %v278
    %v486 = vpop.f32.mrf.mxu0
    %v487 = vadd.f32 %v115, %v486
    %488 = vmatmul.f32.gmra.mxu0 %v281
    %v489 = vpop.f32.mrf.mxu0
    %v490 = vadd.f32 %v115, %v489
    %491 = vmatmul.f32.gmra.mxu0 %v284
    %v492 = vpop.f32.mrf.mxu0
    %v493 = vadd.f32 %v115, %v492
    %494 = vmatmul.f32.gmra.mxu0 %v287
    %v495 = vpop.f32.mrf.mxu0
    %v496 = vadd.f32 %v115, %v495
    %497 = vmatmul.f32.gmra.mxu0 %v290
    %v498 = vpop.f32.mrf.mxu0
    %v499 = vadd.f32 %v115, %v498
    %500 = vmatmul.f32.gmra.mxu0 %v293
    %v501 = vpop.f32.mrf.mxu0
    %v502 = vadd.f32 %v115, %v501
    %503 = vmatmul.f32.gmra.mxu0 %v296
    %v504 = vpop.f32.mrf.mxu0
    %v505 = vadd.f32 %v115, %v504
    %506 = vmatmul.f32.gmra.mxu0 %v299
    %v507 = vpop.f32.mrf.mxu0
    %v508 = vadd.f32 %v115, %v507
    %509 = vmatmul.f32.gmra.mxu0 %v302
    %v510 = vpop.f32.mrf.mxu0
    %v511 = vadd.f32 %v115, %v510
    %512 = vmatmul.f32.gmra.mxu0 %v305
    %v513 = vpop.f32.mrf.mxu0
    %v514 = vadd.f32 %v115, %v513
    %515 = vmatmul.f32.gmra.mxu0 %v308
    %v516 = vpop.f32.mrf.mxu0
    %v517 = vadd.f32 %v115, %v516
    %518 = vdwg.mxu0
    %v519 = vmax.f32 %v328, 0.0
    %v520 = vmax.f32 %v331, 0.0
    %v521 = vmax.f32 %v334, 0.0
    %v522 = vmax.f32 %v337, 0.0
    %v523 = vmax.f32 %v340, 0.0
    %v524 = vmax.f32 %v343, 0.0
    %v525 = vmax.f32 %v346, 0.0
    %v526 = vmax.f32 %v349, 0.0
    %v527 = vmax.f32 %v352, 0.0
    %v528 = vmax.f32 %v355, 0.0
    %v529 = vmax.f32 %v358, 0.0
    %v530 = vmax.f32 %v361, 0.0
    %v531 = vmax.f32 %v364, 0.0
    %v532 = vmax.f32 %v367, 0.0
    %v533 = vmax.f32 %v370, 0.0
    %v534 = vmax.f32 %v373, 0.0
    %v535 = vmax.f32 %v376, 0.0
    %v536 = vmax.f32 %v379, 0.0
    %v537 = vmax.f32 %v382, 0.0
    %v538 = vmax.f32 %v385, 0.0
    %v539 = vmax.f32 %v388, 0.0
    %v540 = vmax.f32 %v391, 0.0
    %v541 = vmax.f32 %v394, 0.0
    %v542 = vmax.f32 %v397, 0.0
    %v543 = vmax.f32 %v400, 0.0
    %v544 = vmax.f32 %v403, 0.0
    %v545 = vmax.f32 %v406, 0.0
    %v546 = vmax.f32 %v409, 0.0
    %v547 = vmax.f32 %v412, 0.0
    %v548 = vmax.f32 %v415, 0.0
    %v549 = vmax.f32 %v418, 0.0
    %v550 = vmax.f32 %v421, 0.0
    %v551 = vmax.f32 %v424, 0.0
    %v552 = vmax.f32 %v427, 0.0
    %v553 = vmax.f32 %v430, 0.0
    %v554 = vmax.f32 %v433, 0.0
    %v555 = vmax.f32 %v436, 0.0
    %v556 = vmax.f32 %v439, 0.0
    %v557 = vmax.f32 %v442, 0.0
    %v558 = vmax.f32 %v445, 0.0
    %v559 = vmax.f32 %v448, 0.0
    %v560 = vmax.f32 %v451, 0.0
    %v561 = vmax.f32 %v454, 0.0
    %v562 = vmax.f32 %v457, 0.0
    %v563 = vmax.f32 %v460, 0.0
    %v564 = vmax.f32 %v463, 0.0
    %v565 = vmax.f32 %v466, 0.0
    %v566 = vmax.f32 %v469, 0.0
    %v567 = vmax.f32 %v472, 0.0
    %v568 = vmax.f32 %v475, 0.0
    %v569 = vmax.f32 %v478, 0.0
    %v570 = vmax.f32 %v481, 0.0
    %v571 = vmax.f32 %v484, 0.0
    %v572 = vmax.f32 %v487, 0.0
    %v573 = vmax.f32 %v490, 0.0
    %v574 = vmax.f32 %v493, 0.0
    %v575 = vmax.f32 %v496, 0.0
    %v576 = vmax.f32 %v499, 0.0
    %v577 = vmax.f32 %v502, 0.0
    %v578 = vmax.f32 %v505, 0.0
    %v579 = vmax.f32 %v508, 0.0
    %v580 = vmax.f32 %v511, 0.0
    %v581 = vmax.f32 %v514, 0.0
    %v582 = vmax.f32 %v517, 0.0
    %v583 = vld [vmem:[%s4] sm:$0xff]
    %v584 = vld [vmem:[%s4 + $0x8] sm:$0xff]
    %v585 = vld [vmem:[%s4 + $0x10] sm:$0xff]
    %v586 = vld [vmem:[%s4 + $0x18] sm:$0xff]
    %v587 = vld [vmem:[%s4 + $0x20] sm:$0xff]
    %v588 = vld [vmem:[%s4 + $0x28] sm:$0xff]
    %v589 = vld [vmem:[%s4 + $0x30] sm:$0xff]
    %v590 = vld [vmem:[%s4 + $0x38] sm:$0xff]
    %v591 = vld [vmem:[%s4 + $0x40] sm:$0xff]
    %v592 = vld [vmem:[%s4 + $0x48] sm:$0xff]
    %v593 = vld [vmem:[%s4 + $0x50] sm:$0xff]
    %v594 = vld [vmem:[%s4 + $0x58] sm:$0xff]
    %v595 = vld [vmem:[%s4 + $0x60] sm:$0xff]
    %v596 = vld [vmem:[%s4 + $0x68] sm:$0xff]
    %v597 = vld [vmem:[%s4 + $0x70] sm:$0xff]
    %v598 = vld [vmem:[%s4 + $0x78] sm:$0xff]
    %v599 = vld [vmem:[%s5] sm:$0x1]
    %v601 = vperm.slane %v599, 0
    %603 = vmatpush.msra.mxu0 %v598
    %604 = vmatpush.msra.mxu0 %v597
    %605 = vmatpush.msra.mxu0 %v596
    %606 = vmatpush.msra.mxu0 %v595
    %607 = vmatpush.msra.mxu0 %v594
    %608 = vmatpush.msra.mxu0 %v593
    %609 = vmatpush.msra.mxu0 %v592
    %610 = vmatpush.msra.mxu0 %v591
    %611 = vmatpush.msra.mxu0 %v590
    %612 = vmatpush.msra.mxu0 %v589
    %613 = vmatpush.msra.mxu0 %v588
    %614 = vmatpush.msra.mxu0 %v587
    %615 = vmatpush.msra.mxu0 %v586
    %616 = vmatpush.msra.mxu0 %v585
    %617 = vmatpush.msra.mxu0 %v584
    %618 = vmatpush.msra.mxu0 %v583
    %619 = vmatmul.f32.gmra.mxu0 %v519
    %v620 = vpop.f32.mrf.mxu0
    %v621 = vadd.f32 %v601, %v620
    %622 = vmatmul.f32.gmra.mxu0 %v520
    %v623 = vpop.f32.mrf.mxu0
    %v624 = vadd.f32 %v601, %v623
    %625 = vmatmul.f32.gmra.mxu0 %v521
    %v626 = vpop.f32.mrf.mxu0
    %v627 = vadd.f32 %v601, %v626
    %628 = vmatmul.f32.gmra.mxu0 %v522
    %v629 = vpop.f32.mrf.mxu0
    %v630 = vadd.f32 %v601, %v629
    %631 = vmatmul.f32.gmra.mxu0 %v523
    %v632 = vpop.f32.mrf.mxu0
    %v633 = vadd.f32 %v601, %v632
    %634 = vmatmul.f32.gmra.mxu0 %v524
    %v635 = vpop.f32.mrf.mxu0
    %v636 = vadd.f32 %v601, %v635
    %637 = vmatmul.f32.gmra.mxu0 %v525
    %v638 = vpop.f32.mrf.mxu0
    %v639 = vadd.f32 %v601, %v638
    %640 = vmatmul.f32.gmra.mxu0 %v526
    %v641 = vpop.f32.mrf.mxu0
    %v642 = vadd.f32 %v601, %v641
    %643 = vmatmul.f32.gmra.mxu0 %v527
    %v644 = vpop.f32.mrf.mxu0
    %v645 = vadd.f32 %v601, %v644
    %646 = vmatmul.f32.gmra.mxu0 %v528
    %v647 = vpop.f32.mrf.mxu0
    %v648 = vadd.f32 %v601, %v647
    %649 = vmatmul.f32.gmra.mxu0 %v529
    %v650 = vpop.f32.mrf.mxu0
    %v651 = vadd.f32 %v601, %v650
    %652 = vmatmul.f32.gmra.mxu0 %v530
    %v653 = vpop.f32.mrf.mxu0
    %v654 = vadd.f32 %v601, %v653
    %655 = vmatmul.f32.gmra.mxu0 %v531
    %v656 = vpop.f32.mrf.mxu0
    %v657 = vadd.f32 %v601, %v656
    %658 = vmatmul.f32.gmra.mxu0 %v532
    %v659 = vpop.f32.mrf.mxu0
    %v660 = vadd.f32 %v601, %v659
    %661 = vmatmul.f32.gmra.mxu0 %v533
    %v662 = vpop.f32.mrf.mxu0
    %v663 = vadd.f32 %v601, %v662
    %664 = vmatmul.f32.gmra.mxu0 %v534
    %v665 = vpop.f32.mrf.mxu0
    %v666 = vadd.f32 %v601, %v665
    %667 = vmatmul.f32.gmra.mxu0 %v535
    %v668 = vpop.f32.mrf.mxu0
    %v669 = vadd.f32 %v601, %v668
    %670 = vmatmul.f32.gmra.mxu0 %v536
    %v671 = vpop.f32.mrf.mxu0
    %v672 = vadd.f32 %v601, %v671
    %673 = vmatmul.f32.gmra.mxu0 %v537
    %v674 = vpop.f32.mrf.mxu0
    %v675 = vadd.f32 %v601, %v674
    %676 = vmatmul.f32.gmra.mxu0 %v538
    %v677 = vpop.f32.mrf.mxu0
    %v678 = vadd.f32 %v601, %v677
    %679 = vmatmul.f32.gmra.mxu0 %v539
    %v680 = vpop.f32.mrf.mxu0
    %v681 = vadd.f32 %v601, %v680
    %682 = vmatmul.f32.gmra.mxu0 %v540
    %v683 = vpop.f32.mrf.mxu0
    %v684 = vadd.f32 %v601, %v683
    %685 = vmatmul.f32.gmra.mxu0 %v541
    %v686 = vpop.f32.mrf.mxu0
    %v687 = vadd.f32 %v601, %v686
    %688 = vmatmul.f32.gmra.mxu0 %v542
    %v689 = vpop.f32.mrf.mxu0
    %v690 = vadd.f32 %v601, %v689
    %691 = vmatmul.f32.gmra.mxu0 %v543
    %v692 = vpop.f32.mrf.mxu0
    %v693 = vadd.f32 %v601, %v692
    %694 = vmatmul.f32.gmra.mxu0 %v544
    %v695 = vpop.f32.mrf.mxu0
    %v696 = vadd.f32 %v601, %v695
    %697 = vmatmul.f32.gmra.mxu0 %v545
    %v698 = vpop.f32.mrf.mxu0
    %v699 = vadd.f32 %v601, %v698
    %700 = vmatmul.f32.gmra.mxu0 %v546
    %v701 = vpop.f32.mrf.mxu0
    %v702 = vadd.f32 %v601, %v701
    %703 = vmatmul.f32.gmra.mxu0 %v547
    %v704 = vpop.f32.mrf.mxu0
    %v705 = vadd.f32 %v601, %v704
    %706 = vmatmul.f32.gmra.mxu0 %v548
    %v707 = vpop.f32.mrf.mxu0
    %v708 = vadd.f32 %v601, %v707
    %709 = vmatmul.f32.gmra.mxu0 %v549
    %v710 = vpop.f32.mrf.mxu0
    %v711 = vadd.f32 %v601, %v710
    %712 = vmatmul.f32.gmra.mxu0 %v550
    %v713 = vpop.f32.mrf.mxu0
    %v714 = vadd.f32 %v601, %v713
    %715 = vmatmul.f32.gmra.mxu0 %v551
    %v716 = vpop.f32.mrf.mxu0
    %v717 = vadd.f32 %v601, %v716
    %718 = vmatmul.f32.gmra.mxu0 %v552
    %v719 = vpop.f32.mrf.mxu0
    %v720 = vadd.f32 %v601, %v719
    %721 = vmatmul.f32.gmra.mxu0 %v553
    %v722 = vpop.f32.mrf.mxu0
    %v723 = vadd.f32 %v601, %v722
    %724 = vmatmul.f32.gmra.mxu0 %v554
    %v725 = vpop.f32.mrf.mxu0
    %v726 = vadd.f32 %v601, %v725
    %727 = vmatmul.f32.gmra.mxu0 %v555
    %v728 = vpop.f32.mrf.mxu0
    %v729 = vadd.f32 %v601, %v728
    %730 = vmatmul.f32.gmra.mxu0 %v556
    %v731 = vpop.f32.mrf.mxu0
    %v732 = vadd.f32 %v601, %v731
    %733 = vmatmul.f32.gmra.mxu0 %v557
    %v734 = vpop.f32.mrf.mxu0
    %v735 = vadd.f32 %v601, %v734
    %736 = vmatmul.f32.gmra.mxu0 %v558
    %v737 = vpop.f32.mrf.mxu0
    %v738 = vadd.f32 %v601, %v737
    %739 = vmatmul.f32.gmra.mxu0 %v559
    %v740 = vpop.f32.mrf.mxu0
    %v741 = vadd.f32 %v601, %v740
    %742 = vmatmul.f32.gmra.mxu0 %v560
    %v743 = vpop.f32.mrf.mxu0
    %v744 = vadd.f32 %v601, %v743
    %745 = vmatmul.f32.gmra.mxu0 %v561
    %v746 = vpop.f32.mrf.mxu0
    %v747 = vadd.f32 %v601, %v746
    %748 = vmatmul.f32.gmra.mxu0 %v562
    %v749 = vpop.f32.mrf.mxu0
    %v750 = vadd.f32 %v601, %v749
    %751 = vmatmul.f32.gmra.mxu0 %v563
    %v752 = vpop.f32.mrf.mxu0
    %v753 = vadd.f32 %v601, %v752
    %754 = vmatmul.f32.gmra.mxu0 %v564
    %v755 = vpop.f32.mrf.mxu0
    %v756 = vadd.f32 %v601, %v755
    %757 = vmatmul.f32.gmra.mxu0 %v565
    %v758 = vpop.f32.mrf.mxu0
    %v759 = vadd.f32 %v601, %v758
    %760 = vmatmul.f32.gmra.mxu0 %v566
    %v761 = vpop.f32.mrf.mxu0
    %v762 = vadd.f32 %v601, %v761
    %763 = vmatmul.f32.gmra.mxu0 %v567
    %v764 = vpop.f32.mrf.mxu0
    %v765 = vadd.f32 %v601, %v764
    %766 = vmatmul.f32.gmra.mxu0 %v568
    %v767 = vpop.f32.mrf.mxu0
    %v768 = vadd.f32 %v601, %v767
    %769 = vmatmul.f32.gmra.mxu0 %v569
    %v770 = vpop.f32.mrf.mxu0
    %v771 = vadd.f32 %v601, %v770
    %772 = vmatmul.f32.gmra.mxu0 %v570
    %v773 = vpop.f32.mrf.mxu0
    %v774 = vadd.f32 %v601, %v773
    %775 = vmatmul.f32.gmra.mxu0 %v571
    %v776 = vpop.f32.mrf.mxu0
    %v777 = vadd.f32 %v601, %v776
    %778 = vmatmul.f32.gmra.mxu0 %v572
    %v779 = vpop.f32.mrf.mxu0
    %v780 = vadd.f32 %v601, %v779
    %781 = vmatmul.f32.gmra.mxu0 %v573
    %v782 = vpop.f32.mrf.mxu0
    %v783 = vadd.f32 %v601, %v782
    %784 = vmatmul.f32.gmra.mxu0 %v574
    %v785 = vpop.f32.mrf.mxu0
    %v786 = vadd.f32 %v601, %v785
    %787 = vmatmul.f32.gmra.mxu0 %v575
    %v788 = vpop.f32.mrf.mxu0
    %v789 = vadd.f32 %v601, %v788
    %790 = vmatmul.f32.gmra.mxu0 %v576
    %v791 = vpop.f32.mrf.mxu0
    %v792 = vadd.f32 %v601, %v791
    %793 = vmatmul.f32.gmra.mxu0 %v577
    %v794 = vpop.f32.mrf.mxu0
    %v795 = vadd.f32 %v601, %v794
    %796 = vmatmul.f32.gmra.mxu0 %v578
    %v797 = vpop.f32.mrf.mxu0
    %v798 = vadd.f32 %v601, %v797
    %799 = vmatmul.f32.gmra.mxu0 %v579
    %v800 = vpop.f32.mrf.mxu0
    %v801 = vadd.f32 %v601, %v800
    %802 = vmatmul.f32.gmra.mxu0 %v580
    %v803 = vpop.f32.mrf.mxu0
    %v804 = vadd.f32 %v601, %v803
    %805 = vmatmul.f32.gmra.mxu0 %v581
    %v806 = vpop.f32.mrf.mxu0
    %v807 = vadd.f32 %v601, %v806
    %808 = vmatmul.f32.gmra.mxu0 %v582
    %v809 = vpop.f32.mrf.mxu0
    %v810 = vadd.f32 %v601, %v809
    %811 = vdwg.mxu0
    %v812 = vmax.f32 %v621, 0.0
    %v813 = vmax.f32 %v624, 0.0
    %v814 = vmax.f32 %v627, 0.0
    %v815 = vmax.f32 %v630, 0.0
    %v816 = vmax.f32 %v633, 0.0
    %v817 = vmax.f32 %v636, 0.0
    %v818 = vmax.f32 %v639, 0.0
    %v819 = vmax.f32 %v642, 0.0
    %v820 = vmax.f32 %v645, 0.0
    %v821 = vmax.f32 %v648, 0.0
    %v822 = vmax.f32 %v651, 0.0
    %v823 = vmax.f32 %v654, 0.0
    %v824 = vmax.f32 %v657, 0.0
    %v825 = vmax.f32 %v660, 0.0
    %v826 = vmax.f32 %v663, 0.0
    %v827 = vmax.f32 %v666, 0.0
    %v828 = vmax.f32 %v669, 0.0
    %v829 = vmax.f32 %v672, 0.0
    %v830 = vmax.f32 %v675, 0.0
    %v831 = vmax.f32 %v678, 0.0
    %v832 = vmax.f32 %v681, 0.0
    %v833 = vmax.f32 %v684, 0.0
    %v834 = vmax.f32 %v687, 0.0
    %v835 = vmax.f32 %v690, 0.0
    %v836 = vmax.f32 %v693, 0.0
    %v837 = vmax.f32 %v696, 0.0
    %v838 = vmax.f32 %v699, 0.0
    %v839 = vmax.f32 %v702, 0.0
    %v840 = vmax.f32 %v705, 0.0
    %v841 = vmax.f32 %v708, 0.0
    %v842 = vmax.f32 %v711, 0.0
    %v843 = vmax.f32 %v714, 0.0
    %v844 = vmax.f32 %v717, 0.0
    %v845 = vmax.f32 %v720, 0.0
    %v846 = vmax.f32 %v723, 0.0
    %v847 = vmax.f32 %v726, 0.0
    %v848 = vmax.f32 %v729, 0.0
    %v849 = vmax.f32 %v732, 0.0
    %v850 = vmax.f32 %v735, 0.0
    %v851 = vmax.f32 %v738, 0.0
    %v852 = vmax.f32 %v741, 0.0
    %v853 = vmax.f32 %v744, 0.0
    %v854 = vmax.f32 %v747, 0.0
    %v855 = vmax.f32 %v750, 0.0
    %v856 = vmax.f32 %v753, 0.0
    %v857 = vmax.f32 %v756, 0.0
    %v858 = vmax.f32 %v759, 0.0
    %v859 = vmax.f32 %v762, 0.0
    %v860 = vmax.f32 %v765, 0.0
    %v861 = vmax.f32 %v768, 0.0
    %v862 = vmax.f32 %v771, 0.0
    %v863 = vmax.f32 %v774, 0.0
    %v864 = vmax.f32 %v777, 0.0
    %v865 = vmax.f32 %v780, 0.0
    %v866 = vmax.f32 %v783, 0.0
    %v867 = vmax.f32 %v786, 0.0
    %v868 = vmax.f32 %v789, 0.0
    %v869 = vmax.f32 %v792, 0.0
    %v870 = vmax.f32 %v795, 0.0
    %v871 = vmax.f32 %v798, 0.0
    %v872 = vmax.f32 %v801, 0.0
    %v873 = vmax.f32 %v804, 0.0
    %v874 = vmax.f32 %v807, 0.0
    %v875 = vmax.f32 %v810, 0.0
    %v876 = vld [vmem:[%s6] sm:$0xff]
    %v877 = vld [vmem:[%s6 + $0x8] sm:$0xff]
    %v878 = vld [vmem:[%s6 + $0x10] sm:$0xff]
    %v879 = vld [vmem:[%s6 + $0x18] sm:$0xff]
    %v880 = vld [vmem:[%s6 + $0x20] sm:$0xff]
    %v881 = vld [vmem:[%s6 + $0x28] sm:$0xff]
    %v882 = vld [vmem:[%s6 + $0x30] sm:$0xff]
    %v883 = vld [vmem:[%s6 + $0x38] sm:$0xff]
    %v884 = vld [vmem:[%s7] sm:$0x1]
    %v886 = vperm.slane %v884, 0
    %vm888 = vcmask 523264
    %v890 = vsel %vm888, %v812, 0
    %v893 = vsel %vm888, %v813, 0
    %v896 = vsel %vm888, %v814, 0
    %v899 = vsel %vm888, %v815, 0
    %v902 = vsel %vm888, %v816, 0
    %v905 = vsel %vm888, %v817, 0
    %v908 = vsel %vm888, %v818, 0
    %v911 = vsel %vm888, %v819, 0
    %v914 = vsel %vm888, %v820, 0
    %v917 = vsel %vm888, %v821, 0
    %v920 = vsel %vm888, %v822, 0
    %v923 = vsel %vm888, %v823, 0
    %v926 = vsel %vm888, %v824, 0
    %v929 = vsel %vm888, %v825, 0
    %v932 = vsel %vm888, %v826, 0
    %v935 = vsel %vm888, %v827, 0
    %v938 = vsel %vm888, %v828, 0
    %v941 = vsel %vm888, %v829, 0
    %v944 = vsel %vm888, %v830, 0
    %v947 = vsel %vm888, %v831, 0
    %v950 = vsel %vm888, %v832, 0
    %v953 = vsel %vm888, %v833, 0
    %v956 = vsel %vm888, %v834, 0
    %v959 = vsel %vm888, %v835, 0
    %v962 = vsel %vm888, %v836, 0
    %v965 = vsel %vm888, %v837, 0
    %v968 = vsel %vm888, %v838, 0
    %v971 = vsel %vm888, %v839, 0
    %v974 = vsel %vm888, %v840, 0
    %v977 = vsel %vm888, %v841, 0
    %v980 = vsel %vm888, %v842, 0
    %v983 = vsel %vm888, %v843, 0
    %v986 = vsel %vm888, %v844, 0
    %v989 = vsel %vm888, %v845, 0
    %v992 = vsel %vm888, %v846, 0
    %v995 = vsel %vm888, %v847, 0
    %v998 = vsel %vm888, %v848, 0
    %v1001 = vsel %vm888, %v849, 0
    %v1004 = vsel %vm888, %v850, 0
    %v1007 = vsel %vm888, %v851, 0
    %v1010 = vsel %vm888, %v852, 0
    %v1013 = vsel %vm888, %v853, 0
    %v1016 = vsel %vm888, %v854, 0
    %v1019 = vsel %vm888, %v855, 0
    %v1022 = vsel %vm888, %v856, 0
    %v1025 = vsel %vm888, %v857, 0
    %v1028 = vsel %vm888, %v858, 0
    %v1031 = vsel %vm888, %v859, 0
    %v1034 = vsel %vm888, %v860, 0
    %v1037 = vsel %vm888, %v861, 0
    %v1040 = vsel %vm888, %v862, 0
    %v1043 = vsel %vm888, %v863, 0
    %v1046 = vsel %vm888, %v864, 0
    %v1049 = vsel %vm888, %v865, 0
    %v1052 = vsel %vm888, %v866, 0
    %v1055 = vsel %vm888, %v867, 0
    %v1058 = vsel %vm888, %v868, 0
    %v1061 = vsel %vm888, %v869, 0
    %v1064 = vsel %vm888, %v870, 0
    %v1067 = vsel %vm888, %v871, 0
    %v1070 = vsel %vm888, %v872, 0
    %v1073 = vsel %vm888, %v873, 0
    %v1076 = vsel %vm888, %v874, 0
    %v1079 = vsel %vm888, %v875, 0
    %1081 = vmatpush.msra.mxu0 0.0
    %1082 = vmatpush.msra.mxu0 0.0
    %1083 = vmatpush.msra.mxu0 0.0
    %1084 = vmatpush.msra.mxu0 0.0
    %1085 = vmatpush.msra.mxu0 0.0
    %1086 = vmatpush.msra.mxu0 0.0
    %1087 = vmatpush.msra.mxu0 0.0
    %1088 = vmatpush.msra.mxu0 0.0
    %1089 = vmatpush.msra.mxu0 %v883
    %1090 = vmatpush.msra.mxu0 %v882
    %1091 = vmatpush.msra.mxu0 %v881
    %1092 = vmatpush.msra.mxu0 %v880
    %1093 = vmatpush.msra.mxu0 %v879
    %1094 = vmatpush.msra.mxu0 %v878
    %1095 = vmatpush.msra.mxu0 %v877
    %1096 = vmatpush.msra.mxu0 %v876
    %1097 = vmatmul.f32.gmra.mxu0 %v890
    %v1098 = vpop.f32.mrf.mxu0
    %v1099 = vadd.f32 %v886, %v1098
    %1100 = vmatmul.f32.gmra.mxu0 %v893
    %v1101 = vpop.f32.mrf.mxu0
    %v1102 = vadd.f32 %v886, %v1101
    %1103 = vmatmul.f32.gmra.mxu0 %v896
    %v1104 = vpop.f32.mrf.mxu0
    %v1105 = vadd.f32 %v886, %v1104
    %1106 = vmatmul.f32.gmra.mxu0 %v899
    %v1107 = vpop.f32.mrf.mxu0
    %v1108 = vadd.f32 %v886, %v1107
    %1109 = vmatmul.f32.gmra.mxu0 %v902
    %v1110 = vpop.f32.mrf.mxu0
    %v1111 = vadd.f32 %v886, %v1110
    %1112 = vmatmul.f32.gmra.mxu0 %v905
    %v1113 = vpop.f32.mrf.mxu0
    %v1114 = vadd.f32 %v886, %v1113
    %1115 = vmatmul.f32.gmra.mxu0 %v908
    %v1116 = vpop.f32.mrf.mxu0
    %v1117 = vadd.f32 %v886, %v1116
    %1118 = vmatmul.f32.gmra.mxu0 %v911
    %v1119 = vpop.f32.mrf.mxu0
    %v1120 = vadd.f32 %v886, %v1119
    %1121 = vmatmul.f32.gmra.mxu0 %v914
    %v1122 = vpop.f32.mrf.mxu0
    %v1123 = vadd.f32 %v886, %v1122
    %1124 = vmatmul.f32.gmra.mxu0 %v917
    %v1125 = vpop.f32.mrf.mxu0
    %v1126 = vadd.f32 %v886, %v1125
    %1127 = vmatmul.f32.gmra.mxu0 %v920
    %v1128 = vpop.f32.mrf.mxu0
    %v1129 = vadd.f32 %v886, %v1128
    %1130 = vmatmul.f32.gmra.mxu0 %v923
    %v1131 = vpop.f32.mrf.mxu0
    %v1132 = vadd.f32 %v886, %v1131
    %1133 = vmatmul.f32.gmra.mxu0 %v926
    %v1134 = vpop.f32.mrf.mxu0
    %v1135 = vadd.f32 %v886, %v1134
    %1136 = vmatmul.f32.gmra.mxu0 %v929
    %v1137 = vpop.f32.mrf.mxu0
    %v1138 = vadd.f32 %v886, %v1137
    %1139 = vmatmul.f32.gmra.mxu0 %v932
    %v1140 = vpop.f32.mrf.mxu0
    %v1141 = vadd.f32 %v886, %v1140
    %1142 = vmatmul.f32.gmra.mxu0 %v935
    %v1143 = vpop.f32.mrf.mxu0
    %v1144 = vadd.f32 %v886, %v1143
    %1145 = vmatmul.f32.gmra.mxu0 %v938
    %v1146 = vpop.f32.mrf.mxu0
    %v1147 = vadd.f32 %v886, %v1146
    %1148 = vmatmul.f32.gmra.mxu0 %v941
    %v1149 = vpop.f32.mrf.mxu0
    %v1150 = vadd.f32 %v886, %v1149
    %1151 = vmatmul.f32.gmra.mxu0 %v944
    %v1152 = vpop.f32.mrf.mxu0
    %v1153 = vadd.f32 %v886, %v1152
    %1154 = vmatmul.f32.gmra.mxu0 %v947
    %v1155 = vpop.f32.mrf.mxu0
    %v1156 = vadd.f32 %v886, %v1155
    %1157 = vmatmul.f32.gmra.mxu0 %v950
    %v1158 = vpop.f32.mrf.mxu0
    %v1159 = vadd.f32 %v886, %v1158
    %1160 = vmatmul.f32.gmra.mxu0 %v953
    %v1161 = vpop.f32.mrf.mxu0
    %v1162 = vadd.f32 %v886, %v1161
    %1163 = vmatmul.f32.gmra.mxu0 %v956
    %v1164 = vpop.f32.mrf.mxu0
    %v1165 = vadd.f32 %v886, %v1164
    %1166 = vmatmul.f32.gmra.mxu0 %v959
    %v1167 = vpop.f32.mrf.mxu0
    %v1168 = vadd.f32 %v886, %v1167
    %1169 = vmatmul.f32.gmra.mxu0 %v962
    %v1170 = vpop.f32.mrf.mxu0
    %v1171 = vadd.f32 %v886, %v1170
    %1172 = vmatmul.f32.gmra.mxu0 %v965
    %v1173 = vpop.f32.mrf.mxu0
    %v1174 = vadd.f32 %v886, %v1173
    %1175 = vmatmul.f32.gmra.mxu0 %v968
    %v1176 = vpop.f32.mrf.mxu0
    %v1177 = vadd.f32 %v886, %v1176
    %1178 = vmatmul.f32.gmra.mxu0 %v971
    %v1179 = vpop.f32.mrf.mxu0
    %v1180 = vadd.f32 %v886, %v1179
    %1181 = vmatmul.f32.gmra.mxu0 %v974
    %v1182 = vpop.f32.mrf.mxu0
    %v1183 = vadd.f32 %v886, %v1182
    %1184 = vmatmul.f32.gmra.mxu0 %v977
    %v1185 = vpop.f32.mrf.mxu0
    %v1186 = vadd.f32 %v886, %v1185
    %1187 = vmatmul.f32.gmra.mxu0 %v980
    %v1188 = vpop.f32.mrf.mxu0
    %v1189 = vadd.f32 %v886, %v1188
    %1190 = vmatmul.f32.gmra.mxu0 %v983
    %v1191 = vpop.f32.mrf.mxu0
    %v1192 = vadd.f32 %v886, %v1191
    %1193 = vmatmul.f32.gmra.mxu0 %v986
    %v1194 = vpop.f32.mrf.mxu0
    %v1195 = vadd.f32 %v886, %v1194
    %1196 = vmatmul.f32.gmra.mxu0 %v989
    %v1197 = vpop.f32.mrf.mxu0
    %v1198 = vadd.f32 %v886, %v1197
    %1199 = vmatmul.f32.gmra.mxu0 %v992
    %v1200 = vpop.f32.mrf.mxu0
    %v1201 = vadd.f32 %v886, %v1200
    %1202 = vmatmul.f32.gmra.mxu0 %v995
    %v1203 = vpop.f32.mrf.mxu0
    %v1204 = vadd.f32 %v886, %v1203
    %1205 = vmatmul.f32.gmra.mxu0 %v998
    %v1206 = vpop.f32.mrf.mxu0
    %v1207 = vadd.f32 %v886, %v1206
    %1208 = vmatmul.f32.gmra.mxu0 %v1001
    %v1209 = vpop.f32.mrf.mxu0
    %v1210 = vadd.f32 %v886, %v1209
    %1211 = vmatmul.f32.gmra.mxu0 %v1004
    %v1212 = vpop.f32.mrf.mxu0
    %v1213 = vadd.f32 %v886, %v1212
    %1214 = vmatmul.f32.gmra.mxu0 %v1007
    %v1215 = vpop.f32.mrf.mxu0
    %v1216 = vadd.f32 %v886, %v1215
    %1217 = vmatmul.f32.gmra.mxu0 %v1010
    %v1218 = vpop.f32.mrf.mxu0
    %v1219 = vadd.f32 %v886, %v1218
    %1220 = vmatmul.f32.gmra.mxu0 %v1013
    %v1221 = vpop.f32.mrf.mxu0
    %v1222 = vadd.f32 %v886, %v1221
    %1223 = vmatmul.f32.gmra.mxu0 %v1016
    %v1224 = vpop.f32.mrf.mxu0
    %v1225 = vadd.f32 %v886, %v1224
    %1226 = vmatmul.f32.gmra.mxu0 %v1019
    %v1227 = vpop.f32.mrf.mxu0
    %v1228 = vadd.f32 %v886, %v1227
    %1229 = vmatmul.f32.gmra.mxu0 %v1022
    %v1230 = vpop.f32.mrf.mxu0
    %v1231 = vadd.f32 %v886, %v1230
    %1232 = vmatmul.f32.gmra.mxu0 %v1025
    %v1233 = vpop.f32.mrf.mxu0
    %v1234 = vadd.f32 %v886, %v1233
    %1235 = vmatmul.f32.gmra.mxu0 %v1028
    %v1236 = vpop.f32.mrf.mxu0
    %v1237 = vadd.f32 %v886, %v1236
    %1238 = vmatmul.f32.gmra.mxu0 %v1031
    %v1239 = vpop.f32.mrf.mxu0
    %v1240 = vadd.f32 %v886, %v1239
    %1241 = vmatmul.f32.gmra.mxu0 %v1034
    %v1242 = vpop.f32.mrf.mxu0
    %v1243 = vadd.f32 %v886, %v1242
    %1244 = vmatmul.f32.gmra.mxu0 %v1037
    %v1245 = vpop.f32.mrf.mxu0
    %v1246 = vadd.f32 %v886, %v1245
    %1247 = vmatmul.f32.gmra.mxu0 %v1040
    %v1248 = vpop.f32.mrf.mxu0
    %v1249 = vadd.f32 %v886, %v1248
    %1250 = vmatmul.f32.gmra.mxu0 %v1043
    %v1251 = vpop.f32.mrf.mxu0
    %v1252 = vadd.f32 %v886, %v1251
    %1253 = vmatmul.f32.gmra.mxu0 %v1046
    %v1254 = vpop.f32.mrf.mxu0
    %v1255 = vadd.f32 %v886, %v1254
    %1256 = vmatmul.f32.gmra.mxu0 %v1049
    %v1257 = vpop.f32.mrf.mxu0
    %v1258 = vadd.f32 %v886, %v1257
    %1259 = vmatmul.f32.gmra.mxu0 %v1052
    %v1260 = vpop.f32.mrf.mxu0
    %v1261 = vadd.f32 %v886, %v1260
    %1262 = vmatmul.f32.gmra.mxu0 %v1055
    %v1263 = vpop.f32.mrf.mxu0
    %v1264 = vadd.f32 %v886, %v1263
    %1265 = vmatmul.f32.gmra.mxu0 %v1058
    %v1266 = vpop.f32.mrf.mxu0
    %v1267 = vadd.f32 %v886, %v1266
    %1268 = vmatmul.f32.gmra.mxu0 %v1061
    %v1269 = vpop.f32.mrf.mxu0
    %v1270 = vadd.f32 %v886, %v1269
    %1271 = vmatmul.f32.gmra.mxu0 %v1064
    %v1272 = vpop.f32.mrf.mxu0
    %v1273 = vadd.f32 %v886, %v1272
    %1274 = vmatmul.f32.gmra.mxu0 %v1067
    %v1275 = vpop.f32.mrf.mxu0
    %v1276 = vadd.f32 %v886, %v1275
    %1277 = vmatmul.f32.gmra.mxu0 %v1070
    %v1278 = vpop.f32.mrf.mxu0
    %v1279 = vadd.f32 %v886, %v1278
    %1280 = vmatmul.f32.gmra.mxu0 %v1073
    %v1281 = vpop.f32.mrf.mxu0
    %v1282 = vadd.f32 %v886, %v1281
    %1283 = vmatmul.f32.gmra.mxu0 %v1076
    %v1284 = vpop.f32.mrf.mxu0
    %v1285 = vadd.f32 %v886, %v1284
    %1286 = vmatmul.f32.gmra.mxu0 %v1079
    %v1287 = vpop.f32.mrf.mxu0
    %v1288 = vadd.f32 %v886, %v1287
    %1289 = vdwg.mxu0
    %v1290 = vxor.u32 %v1099, 2147483648
    %v1291 = vxor.u32 %v1102, 2147483648
    %v1292 = vxor.u32 %v1105, 2147483648
    %v1293 = vxor.u32 %v1108, 2147483648
    %v1294 = vxor.u32 %v1111, 2147483648
    %v1295 = vxor.u32 %v1114, 2147483648
    %v1296 = vxor.u32 %v1117, 2147483648
    %v1297 = vxor.u32 %v1120, 2147483648
    %v1298 = vxor.u32 %v1123, 2147483648
    %v1299 = vxor.u32 %v1126, 2147483648
    %v1300 = vxor.u32 %v1129, 2147483648
    %v1301 = vxor.u32 %v1132, 2147483648
    %v1302 = vxor.u32 %v1135, 2147483648
    %v1303 = vxor.u32 %v1138, 2147483648
    %v1304 = vxor.u32 %v1141, 2147483648
    %v1305 = vxor.u32 %v1144, 2147483648
    %v1306 = vxor.u32 %v1147, 2147483648
    %v1307 = vxor.u32 %v1150, 2147483648
    %v1308 = vxor.u32 %v1153, 2147483648
    %v1309 = vxor.u32 %v1156, 2147483648
    %v1310 = vxor.u32 %v1159, 2147483648
    %v1311 = vxor.u32 %v1162, 2147483648
    %v1312 = vxor.u32 %v1165, 2147483648
    %v1313 = vxor.u32 %v1168, 2147483648
    %v1314 = vxor.u32 %v1171, 2147483648
    %v1315 = vxor.u32 %v1174, 2147483648
    %v1316 = vxor.u32 %v1177, 2147483648
    %v1317 = vxor.u32 %v1180, 2147483648
    %v1318 = vxor.u32 %v1183, 2147483648
    %v1319 = vxor.u32 %v1186, 2147483648
    %v1320 = vxor.u32 %v1189, 2147483648
    %v1321 = vxor.u32 %v1192, 2147483648
    %v1322 = vxor.u32 %v1195, 2147483648
    %v1323 = vxor.u32 %v1198, 2147483648
    %v1324 = vxor.u32 %v1201, 2147483648
    %v1325 = vxor.u32 %v1204, 2147483648
    %v1326 = vxor.u32 %v1207, 2147483648
    %v1327 = vxor.u32 %v1210, 2147483648
    %v1328 = vxor.u32 %v1213, 2147483648
    %v1329 = vxor.u32 %v1216, 2147483648
    %v1330 = vxor.u32 %v1219, 2147483648
    %v1331 = vxor.u32 %v1222, 2147483648
    %v1332 = vxor.u32 %v1225, 2147483648
    %v1333 = vxor.u32 %v1228, 2147483648
    %v1334 = vxor.u32 %v1231, 2147483648
    %v1335 = vxor.u32 %v1234, 2147483648
    %v1336 = vxor.u32 %v1237, 2147483648
    %v1337 = vxor.u32 %v1240, 2147483648
    %v1338 = vxor.u32 %v1243, 2147483648
    %v1339 = vxor.u32 %v1246, 2147483648
    %v1340 = vxor.u32 %v1249, 2147483648
    %v1341 = vxor.u32 %v1252, 2147483648
    %v1342 = vxor.u32 %v1255, 2147483648
    %v1343 = vxor.u32 %v1258, 2147483648
    %v1344 = vxor.u32 %v1261, 2147483648
    %v1345 = vxor.u32 %v1264, 2147483648
    %v1346 = vxor.u32 %v1267, 2147483648
    %v1347 = vxor.u32 %v1270, 2147483648
    %v1348 = vxor.u32 %v1273, 2147483648
    %v1349 = vxor.u32 %v1276, 2147483648
    %v1350 = vxor.u32 %v1279, 2147483648
    %v1351 = vxor.u32 %v1282, 2147483648
    %v1352 = vxor.u32 %v1285, 2147483648
    %v1353 = vxor.u32 %v1288, 2147483648
    %v1354 = vmul.f32 %v1290, 1.442695
    %v1355 = vpow.pop %v1354
    %v1356 = vmul.f32 %v1291, 1.442695
    %v1357 = vpow.pop %v1356
    %v1358 = vmul.f32 %v1292, 1.442695
    %v1359 = vpow.pop %v1358
    %v1360 = vmul.f32 %v1293, 1.442695
    %v1361 = vpow.pop %v1360
    %v1362 = vmul.f32 %v1294, 1.442695
    %v1363 = vpow.pop %v1362
    %v1364 = vmul.f32 %v1295, 1.442695
    %v1365 = vpow.pop %v1364
    %v1366 = vmul.f32 %v1296, 1.442695
    %v1367 = vpow.pop %v1366
    %v1368 = vmul.f32 %v1297, 1.442695
    %v1369 = vpow.pop %v1368
    %v1370 = vmul.f32 %v1298, 1.442695
    %v1371 = vpow.pop %v1370
    %v1372 = vmul.f32 %v1299, 1.442695
    %v1373 = vpow.pop %v1372
    %v1374 = vmul.f32 %v1300, 1.442695
    %v1375 = vpow.pop %v1374
    %v1376 = vmul.f32 %v1301, 1.442695
    %v1377 = vpow.pop %v1376
    %v1378 = vmul.f32 %v1302, 1.442695
    %v1379 = vpow.pop %v1378
    %v1380 = vmul.f32 %v1303, 1.442695
    %v1381 = vpow.pop %v1380
    %v1382 = vmul.f32 %v1304, 1.442695
    %v1383 = vpow.pop %v1382
    %v1384 = vmul.f32 %v1305, 1.442695
    %v1385 = vpow.pop %v1384
    %v1386 = vmul.f32 %v1306, 1.442695
    %v1387 = vpow.pop %v1386
    %v1388 = vmul.f32 %v1307, 1.442695
    %v1389 = vpow.pop %v1388
    %v1390 = vmul.f32 %v1308, 1.442695
    %v1391 = vpow.pop %v1390
    %v1392 = vmul.f32 %v1309, 1.442695
    %v1393 = vpow.pop %v1392
    %v1394 = vmul.f32 %v1310, 1.442695
    %v1395 = vpow.pop %v1394
    %v1396 = vmul.f32 %v1311, 1.442695
    %v1397 = vpow.pop %v1396
    %v1398 = vmul.f32 %v1312, 1.442695
    %v1399 = vpow.pop %v1398
    %v1400 = vmul.f32 %v1313, 1.442695
    %v1401 = vpow.pop %v1400
    %v1402 = vmul.f32 %v1314, 1.442695
    %v1403 = vpow.pop %v1402
    %v1404 = vmul.f32 %v1315, 1.442695
    %v1405 = vpow.pop %v1404
    %v1406 = vmul.f32 %v1316, 1.442695
    %v1407 = vpow.pop %v1406
    %v1408 = vmul.f32 %v1317, 1.442695
    %v1409 = vpow.pop %v1408
    %v1410 = vmul.f32 %v1318, 1.442695
    %v1411 = vpow.pop %v1410
    %v1412 = vmul.f32 %v1319, 1.442695
    %v1413 = vpow.pop %v1412
    %v1414 = vmul.f32 %v1320, 1.442695
    %v1415 = vpow.pop %v1414
    %v1416 = vmul.f32 %v1321, 1.442695
    %v1417 = vpow.pop %v1416
    %v1418 = vmul.f32 %v1322, 1.442695
    %v1419 = vpow.pop %v1418
    %v1420 = vmul.f32 %v1323, 1.442695
    %v1421 = vpow.pop %v1420
    %v1422 = vmul.f32 %v1324, 1.442695
    %v1423 = vpow.pop %v1422
    %v1424 = vmul.f32 %v1325, 1.442695
    %v1425 = vpow.pop %v1424
    %v1426 = vmul.f32 %v1326, 1.442695
    %v1427 = vpow.pop %v1426
    %v1428 = vmul.f32 %v1327, 1.442695
    %v1429 = vpow.pop %v1428
    %v1430 = vmul.f32 %v1328, 1.442695
    %v1431 = vpow.pop %v1430
    %v1432 = vmul.f32 %v1329, 1.442695
    %v1433 = vpow.pop %v1432
    %v1434 = vmul.f32 %v1330, 1.442695
    %v1435 = vpow.pop %v1434
    %v1436 = vmul.f32 %v1331, 1.442695
    %v1437 = vpow.pop %v1436
    %v1438 = vmul.f32 %v1332, 1.442695
    %v1439 = vpow.pop %v1438
    %v1440 = vmul.f32 %v1333, 1.442695
    %v1441 = vpow.pop %v1440
    %v1442 = vmul.f32 %v1334, 1.442695
    %v1443 = vpow.pop %v1442
    %v1444 = vmul.f32 %v1335, 1.442695
    %v1445 = vpow.pop %v1444
    %v1446 = vmul.f32 %v1336, 1.442695
    %v1447 = vpow.pop %v1446
    %v1448 = vmul.f32 %v1337, 1.442695
    %v1449 = vpow.pop %v1448
    %v1450 = vmul.f32 %v1338, 1.442695
    %v1451 = vpow.pop %v1450
    %v1452 = vmul.f32 %v1339, 1.442695
    %v1453 = vpow.pop %v1452
    %v1454 = vmul.f32 %v1340, 1.442695
    %v1455 = vpow.pop %v1454
    %v1456 = vmul.f32 %v1341, 1.442695
    %v1457 = vpow.pop %v1456
    %v1458 = vmul.f32 %v1342, 1.442695
    %v1459 = vpow.pop %v1458
    %v1460 = vmul.f32 %v1343, 1.442695
    %v1461 = vpow.pop %v1460
    %v1462 = vmul.f32 %v1344, 1.442695
    %v1463 = vpow.pop %v1462
    %v1464 = vmul.f32 %v1345, 1.442695
    %v1465 = vpow.pop %v1464
    %v1466 = vmul.f32 %v1346, 1.442695
    %v1467 = vpow.pop %v1466
    %v1468 = vmul.f32 %v1347, 1.442695
    %v1469 = vpow.pop %v1468
    %v1470 = vmul.f32 %v1348, 1.442695
    %v1471 = vpow.pop %v1470
    %v1472 = vmul.f32 %v1349, 1.442695
    %v1473 = vpow.pop %v1472
    %v1474 = vmul.f32 %v1350, 1.442695
    %v1475 = vpow.pop %v1474
    %v1476 = vmul.f32 %v1351, 1.442695
    %v1477 = vpow.pop %v1476
    %v1478 = vmul.f32 %v1352, 1.442695
    %v1479 = vpow.pop %v1478
    %v1480 = vmul.f32 %v1353, 1.442695
    %v1481 = vpow.pop %v1480
    %v1482 = vadd.f32 %v1355, 1.0
    %v1483 = vadd.f32 %v1357, 1.0
    %v1484 = vadd.f32 %v1359, 1.0
    %v1485 = vadd.f32 %v1361, 1.0
    %v1486 = vadd.f32 %v1363, 1.0
    %v1487 = vadd.f32 %v1365, 1.0
    %v1488 = vadd.f32 %v1367, 1.0
    %v1489 = vadd.f32 %v1369, 1.0
    %v1490 = vadd.f32 %v1371, 1.0
    %v1491 = vadd.f32 %v1373, 1.0
    %v1492 = vadd.f32 %v1375, 1.0
    %v1493 = vadd.f32 %v1377, 1.0
    %v1494 = vadd.f32 %v1379, 1.0
    %v1495 = vadd.f32 %v1381, 1.0
    %v1496 = vadd.f32 %v1383, 1.0
    %v1497 = vadd.f32 %v1385, 1.0
    %v1498 = vadd.f32 %v1387, 1.0
    %v1499 = vadd.f32 %v1389, 1.0
    %v1500 = vadd.f32 %v1391, 1.0
    %v1501 = vadd.f32 %v1393, 1.0
    %v1502 = vadd.f32 %v1395, 1.0
    %v1503 = vadd.f32 %v1397, 1.0
    %v1504 = vadd.f32 %v1399, 1.0
    %v1505 = vadd.f32 %v1401, 1.0
    %v1506 = vadd.f32 %v1403, 1.0
    %v1507 = vadd.f32 %v1405, 1.0
    %v1508 = vadd.f32 %v1407, 1.0
    %v1509 = vadd.f32 %v1409, 1.0
    %v1510 = vadd.f32 %v1411, 1.0
    %v1511 = vadd.f32 %v1413, 1.0
    %v1512 = vadd.f32 %v1415, 1.0
    %v1513 = vadd.f32 %v1417, 1.0
    %v1514 = vadd.f32 %v1419, 1.0
    %v1515 = vadd.f32 %v1421, 1.0
    %v1516 = vadd.f32 %v1423, 1.0
    %v1517 = vadd.f32 %v1425, 1.0
    %v1518 = vadd.f32 %v1427, 1.0
    %v1519 = vadd.f32 %v1429, 1.0
    %v1520 = vadd.f32 %v1431, 1.0
    %v1521 = vadd.f32 %v1433, 1.0
    %v1522 = vadd.f32 %v1435, 1.0
    %v1523 = vadd.f32 %v1437, 1.0
    %v1524 = vadd.f32 %v1439, 1.0
    %v1525 = vadd.f32 %v1441, 1.0
    %v1526 = vadd.f32 %v1443, 1.0
    %v1527 = vadd.f32 %v1445, 1.0
    %v1528 = vadd.f32 %v1447, 1.0
    %v1529 = vadd.f32 %v1449, 1.0
    %v1530 = vadd.f32 %v1451, 1.0
    %v1531 = vadd.f32 %v1453, 1.0
    %v1532 = vadd.f32 %v1455, 1.0
    %v1533 = vadd.f32 %v1457, 1.0
    %v1534 = vadd.f32 %v1459, 1.0
    %v1535 = vadd.f32 %v1461, 1.0
    %v1536 = vadd.f32 %v1463, 1.0
    %v1537 = vadd.f32 %v1465, 1.0
    %v1538 = vadd.f32 %v1467, 1.0
    %v1539 = vadd.f32 %v1469, 1.0
    %v1540 = vadd.f32 %v1471, 1.0
    %v1541 = vadd.f32 %v1473, 1.0
    %v1542 = vadd.f32 %v1475, 1.0
    %v1543 = vadd.f32 %v1477, 1.0
    %v1544 = vadd.f32 %v1479, 1.0
    %v1545 = vadd.f32 %v1481, 1.0
    %v1546 = vrcp.pop %v1482
    %v1547 = vmul.f32 %v1482, %v1546
    %v1548 = vsub.f32 1.0, %v1547
    %v1549 = vmul.f32 %v1546, %v1548
    %v1550 = vadd.f32 %v1546, %v1549
    %vm1551 = vweird.f32 %v1482
    %vm1552 = vweird.f32 %v1546
    %vm1553 = vmor %vm1551, %vm1552
    %v1554 = vsel %vm1553, %v1546, %v1550
    %v1555 = vand.u32 2147483647, %v1482
    %vm1556 = vcmp.eq.f32.partialorder %v1555, 8.507059e+37
    %v1557 = vand.u32 %v1482, 2147483648
    %v1558 = vor.u32 1.1754944e-38, %v1557
    %v1559 = vsel %vm1556, %v1558, %v1554
    %v1560 = vmul.f32 1.0, %v1559
    %v1561 = vrcp.pop %v1483
    %v1562 = vmul.f32 %v1483, %v1561
    %v1563 = vsub.f32 1.0, %v1562
    %v1564 = vmul.f32 %v1561, %v1563
    %v1565 = vadd.f32 %v1561, %v1564
    %vm1566 = vweird.f32 %v1483
    %vm1567 = vweird.f32 %v1561
    %vm1568 = vmor %vm1566, %vm1567
    %v1569 = vsel %vm1568, %v1561, %v1565
    %v1570 = vand.u32 2147483647, %v1483
    %vm1571 = vcmp.eq.f32.partialorder %v1570, 8.507059e+37
    %v1572 = vand.u32 %v1483, 2147483648
    %v1573 = vor.u32 1.1754944e-38, %v1572
    %v1574 = vsel %vm1571, %v1573, %v1569
    %v1575 = vmul.f32 1.0, %v1574
    %v1576 = vrcp.pop %v1484
    %v1577 = vmul.f32 %v1484, %v1576
    %v1578 = vsub.f32 1.0, %v1577
    %v1579 = vmul.f32 %v1576, %v1578
    %v1580 = vadd.f32 %v1576, %v1579
    %vm1581 = vweird.f32 %v1484
    %vm1582 = vweird.f32 %v1576
    %vm1583 = vmor %vm1581, %vm1582
    %v1584 = vsel %vm1583, %v1576, %v1580
    %v1585 = vand.u32 2147483647, %v1484
    %vm1586 = vcmp.eq.f32.partialorder %v1585, 8.507059e+37
    %v1587 = vand.u32 %v1484, 2147483648
    %v1588 = vor.u32 1.1754944e-38, %v1587
    %v1589 = vsel %vm1586, %v1588, %v1584
    %v1590 = vmul.f32 1.0, %v1589
    %v1591 = vrcp.pop %v1485
    %v1592 = vmul.f32 %v1485, %v1591
    %v1593 = vsub.f32 1.0, %v1592
    %v1594 = vmul.f32 %v1591, %v1593
    %v1595 = vadd.f32 %v1591, %v1594
    %vm1596 = vweird.f32 %v1485
    %vm1597 = vweird.f32 %v1591
    %vm1598 = vmor %vm1596, %vm1597
    %v1599 = vsel %vm1598, %v1591, %v1595
    %v1600 = vand.u32 2147483647, %v1485
    %vm1601 = vcmp.eq.f32.partialorder %v1600, 8.507059e+37
    %v1602 = vand.u32 %v1485, 2147483648
    %v1603 = vor.u32 1.1754944e-38, %v1602
    %v1604 = vsel %vm1601, %v1603, %v1599
    %v1605 = vmul.f32 1.0, %v1604
    %v1606 = vrcp.pop %v1486
    %v1607 = vmul.f32 %v1486, %v1606
    %v1608 = vsub.f32 1.0, %v1607
    %v1609 = vmul.f32 %v1606, %v1608
    %v1610 = vadd.f32 %v1606, %v1609
    %vm1611 = vweird.f32 %v1486
    %vm1612 = vweird.f32 %v1606
    %vm1613 = vmor %vm1611, %vm1612
    %v1614 = vsel %vm1613, %v1606, %v1610
    %v1615 = vand.u32 2147483647, %v1486
    %vm1616 = vcmp.eq.f32.partialorder %v1615, 8.507059e+37
    %v1617 = vand.u32 %v1486, 2147483648
    %v1618 = vor.u32 1.1754944e-38, %v1617
    %v1619 = vsel %vm1616, %v1618, %v1614
    %v1620 = vmul.f32 1.0, %v1619
    %v1621 = vrcp.pop %v1487
    %v1622 = vmul.f32 %v1487, %v1621
    %v1623 = vsub.f32 1.0, %v1622
    %v1624 = vmul.f32 %v1621, %v1623
    %v1625 = vadd.f32 %v1621, %v1624
    %vm1626 = vweird.f32 %v1487
    %vm1627 = vweird.f32 %v1621
    %vm1628 = vmor %vm1626, %vm1627
    %v1629 = vsel %vm1628, %v1621, %v1625
    %v1630 = vand.u32 2147483647, %v1487
    %vm1631 = vcmp.eq.f32.partialorder %v1630, 8.507059e+37
    %v1632 = vand.u32 %v1487, 2147483648
    %v1633 = vor.u32 1.1754944e-38, %v1632
    %v1634 = vsel %vm1631, %v1633, %v1629
    %v1635 = vmul.f32 1.0, %v1634
    %v1636 = vrcp.pop %v1488
    %v1637 = vmul.f32 %v1488, %v1636
    %v1638 = vsub.f32 1.0, %v1637
    %v1639 = vmul.f32 %v1636, %v1638
    %v1640 = vadd.f32 %v1636, %v1639
    %vm1641 = vweird.f32 %v1488
    %vm1642 = vweird.f32 %v1636
    %vm1643 = vmor %vm1641, %vm1642
    %v1644 = vsel %vm1643, %v1636, %v1640
    %v1645 = vand.u32 2147483647, %v1488
    %vm1646 = vcmp.eq.f32.partialorder %v1645, 8.507059e+37
    %v1647 = vand.u32 %v1488, 2147483648
    %v1648 = vor.u32 1.1754944e-38, %v1647
    %v1649 = vsel %vm1646, %v1648, %v1644
    %v1650 = vmul.f32 1.0, %v1649
    %v1651 = vrcp.pop %v1489
    %v1652 = vmul.f32 %v1489, %v1651
    %v1653 = vsub.f32 1.0, %v1652
    %v1654 = vmul.f32 %v1651, %v1653
    %v1655 = vadd.f32 %v1651, %v1654
    %vm1656 = vweird.f32 %v1489
    %vm1657 = vweird.f32 %v1651
    %vm1658 = vmor %vm1656, %vm1657
    %v1659 = vsel %vm1658, %v1651, %v1655
    %v1660 = vand.u32 2147483647, %v1489
    %vm1661 = vcmp.eq.f32.partialorder %v1660, 8.507059e+37
    %v1662 = vand.u32 %v1489, 2147483648
    %v1663 = vor.u32 1.1754944e-38, %v1662
    %v1664 = vsel %vm1661, %v1663, %v1659
    %v1665 = vmul.f32 1.0, %v1664
    %v1666 = vrcp.pop %v1490
    %v1667 = vmul.f32 %v1490, %v1666
    %v1668 = vsub.f32 1.0, %v1667
    %v1669 = vmul.f32 %v1666, %v1668
    %v1670 = vadd.f32 %v1666, %v1669
    %vm1671 = vweird.f32 %v1490
    %vm1672 = vweird.f32 %v1666
    %vm1673 = vmor %vm1671, %vm1672
    %v1674 = vsel %vm1673, %v1666, %v1670
    %v1675 = vand.u32 2147483647, %v1490
    %vm1676 = vcmp.eq.f32.partialorder %v1675, 8.507059e+37
    %v1677 = vand.u32 %v1490, 2147483648
    %v1678 = vor.u32 1.1754944e-38, %v1677
    %v1679 = vsel %vm1676, %v1678, %v1674
    %v1680 = vmul.f32 1.0, %v1679
    %v1681 = vrcp.pop %v1491
    %v1682 = vmul.f32 %v1491, %v1681
    %v1683 = vsub.f32 1.0, %v1682
    %v1684 = vmul.f32 %v1681, %v1683
    %v1685 = vadd.f32 %v1681, %v1684
    %vm1686 = vweird.f32 %v1491
    %vm1687 = vweird.f32 %v1681
    %vm1688 = vmor %vm1686, %vm1687
    %v1689 = vsel %vm1688, %v1681, %v1685
    %v1690 = vand.u32 2147483647, %v1491
    %vm1691 = vcmp.eq.f32.partialorder %v1690, 8.507059e+37
    %v1692 = vand.u32 %v1491, 2147483648
    %v1693 = vor.u32 1.1754944e-38, %v1692
    %v1694 = vsel %vm1691, %v1693, %v1689
    %v1695 = vmul.f32 1.0, %v1694
    %v1696 = vrcp.pop %v1492
    %v1697 = vmul.f32 %v1492, %v1696
    %v1698 = vsub.f32 1.0, %v1697
    %v1699 = vmul.f32 %v1696, %v1698
    %v1700 = vadd.f32 %v1696, %v1699
    %vm1701 = vweird.f32 %v1492
    %vm1702 = vweird.f32 %v1696
    %vm1703 = vmor %vm1701, %vm1702
    %v1704 = vsel %vm1703, %v1696, %v1700
    %v1705 = vand.u32 2147483647, %v1492
    %vm1706 = vcmp.eq.f32.partialorder %v1705, 8.507059e+37
    %v1707 = vand.u32 %v1492, 2147483648
    %v1708 = vor.u32 1.1754944e-38, %v1707
    %v1709 = vsel %vm1706, %v1708, %v1704
    %v1710 = vmul.f32 1.0, %v1709
    %v1711 = vrcp.pop %v1493
    %v1712 = vmul.f32 %v1493, %v1711
    %v1713 = vsub.f32 1.0, %v1712
    %v1714 = vmul.f32 %v1711, %v1713
    %v1715 = vadd.f32 %v1711, %v1714
    %vm1716 = vweird.f32 %v1493
    %vm1717 = vweird.f32 %v1711
    %vm1718 = vmor %vm1716, %vm1717
    %v1719 = vsel %vm1718, %v1711, %v1715
    %v1720 = vand.u32 2147483647, %v1493
    %vm1721 = vcmp.eq.f32.partialorder %v1720, 8.507059e+37
    %v1722 = vand.u32 %v1493, 2147483648
    %v1723 = vor.u32 1.1754944e-38, %v1722
    %v1724 = vsel %vm1721, %v1723, %v1719
    %v1725 = vmul.f32 1.0, %v1724
    %v1726 = vrcp.pop %v1494
    %v1727 = vmul.f32 %v1494, %v1726
    %v1728 = vsub.f32 1.0, %v1727
    %v1729 = vmul.f32 %v1726, %v1728
    %v1730 = vadd.f32 %v1726, %v1729
    %vm1731 = vweird.f32 %v1494
    %vm1732 = vweird.f32 %v1726
    %vm1733 = vmor %vm1731, %vm1732
    %v1734 = vsel %vm1733, %v1726, %v1730
    %v1735 = vand.u32 2147483647, %v1494
    %vm1736 = vcmp.eq.f32.partialorder %v1735, 8.507059e+37
    %v1737 = vand.u32 %v1494, 2147483648
    %v1738 = vor.u32 1.1754944e-38, %v1737
    %v1739 = vsel %vm1736, %v1738, %v1734
    %v1740 = vmul.f32 1.0, %v1739
    %v1741 = vrcp.pop %v1495
    %v1742 = vmul.f32 %v1495, %v1741
    %v1743 = vsub.f32 1.0, %v1742
    %v1744 = vmul.f32 %v1741, %v1743
    %v1745 = vadd.f32 %v1741, %v1744
    %vm1746 = vweird.f32 %v1495
    %vm1747 = vweird.f32 %v1741
    %vm1748 = vmor %vm1746, %vm1747
    %v1749 = vsel %vm1748, %v1741, %v1745
    %v1750 = vand.u32 2147483647, %v1495
    %vm1751 = vcmp.eq.f32.partialorder %v1750, 8.507059e+37
    %v1752 = vand.u32 %v1495, 2147483648
    %v1753 = vor.u32 1.1754944e-38, %v1752
    %v1754 = vsel %vm1751, %v1753, %v1749
    %v1755 = vmul.f32 1.0, %v1754
    %v1756 = vrcp.pop %v1496
    %v1757 = vmul.f32 %v1496, %v1756
    %v1758 = vsub.f32 1.0, %v1757
    %v1759 = vmul.f32 %v1756, %v1758
    %v1760 = vadd.f32 %v1756, %v1759
    %vm1761 = vweird.f32 %v1496
    %vm1762 = vweird.f32 %v1756
    %vm1763 = vmor %vm1761, %vm1762
    %v1764 = vsel %vm1763, %v1756, %v1760
    %v1765 = vand.u32 2147483647, %v1496
    %vm1766 = vcmp.eq.f32.partialorder %v1765, 8.507059e+37
    %v1767 = vand.u32 %v1496, 2147483648
    %v1768 = vor.u32 1.1754944e-38, %v1767
    %v1769 = vsel %vm1766, %v1768, %v1764
    %v1770 = vmul.f32 1.0, %v1769
    %v1771 = vrcp.pop %v1497
    %v1772 = vmul.f32 %v1497, %v1771
    %v1773 = vsub.f32 1.0, %v1772
    %v1774 = vmul.f32 %v1771, %v1773
    %v1775 = vadd.f32 %v1771, %v1774
    %vm1776 = vweird.f32 %v1497
    %vm1777 = vweird.f32 %v1771
    %vm1778 = vmor %vm1776, %vm1777
    %v1779 = vsel %vm1778, %v1771, %v1775
    %v1780 = vand.u32 2147483647, %v1497
    %vm1781 = vcmp.eq.f32.partialorder %v1780, 8.507059e+37
    %v1782 = vand.u32 %v1497, 2147483648
    %v1783 = vor.u32 1.1754944e-38, %v1782
    %v1784 = vsel %vm1781, %v1783, %v1779
    %v1785 = vmul.f32 1.0, %v1784
    %v1786 = vrcp.pop %v1498
    %v1787 = vmul.f32 %v1498, %v1786
    %v1788 = vsub.f32 1.0, %v1787
    %v1789 = vmul.f32 %v1786, %v1788
    %v1790 = vadd.f32 %v1786, %v1789
    %vm1791 = vweird.f32 %v1498
    %vm1792 = vweird.f32 %v1786
    %vm1793 = vmor %vm1791, %vm1792
    %v1794 = vsel %vm1793, %v1786, %v1790
    %v1795 = vand.u32 2147483647, %v1498
    %vm1796 = vcmp.eq.f32.partialorder %v1795, 8.507059e+37
    %v1797 = vand.u32 %v1498, 2147483648
    %v1798 = vor.u32 1.1754944e-38, %v1797
    %v1799 = vsel %vm1796, %v1798, %v1794
    %v1800 = vmul.f32 1.0, %v1799
    %v1801 = vrcp.pop %v1499
    %v1802 = vmul.f32 %v1499, %v1801
    %v1803 = vsub.f32 1.0, %v1802
    %v1804 = vmul.f32 %v1801, %v1803
    %v1805 = vadd.f32 %v1801, %v1804
    %vm1806 = vweird.f32 %v1499
    %vm1807 = vweird.f32 %v1801
    %vm1808 = vmor %vm1806, %vm1807
    %v1809 = vsel %vm1808, %v1801, %v1805
    %v1810 = vand.u32 2147483647, %v1499
    %vm1811 = vcmp.eq.f32.partialorder %v1810, 8.507059e+37
    %v1812 = vand.u32 %v1499, 2147483648
    %v1813 = vor.u32 1.1754944e-38, %v1812
    %v1814 = vsel %vm1811, %v1813, %v1809
    %v1815 = vmul.f32 1.0, %v1814
    %v1816 = vrcp.pop %v1500
    %v1817 = vmul.f32 %v1500, %v1816
    %v1818 = vsub.f32 1.0, %v1817
    %v1819 = vmul.f32 %v1816, %v1818
    %v1820 = vadd.f32 %v1816, %v1819
    %vm1821 = vweird.f32 %v1500
    %vm1822 = vweird.f32 %v1816
    %vm1823 = vmor %vm1821, %vm1822
    %v1824 = vsel %vm1823, %v1816, %v1820
    %v1825 = vand.u32 2147483647, %v1500
    %vm1826 = vcmp.eq.f32.partialorder %v1825, 8.507059e+37
    %v1827 = vand.u32 %v1500, 2147483648
    %v1828 = vor.u32 1.1754944e-38, %v1827
    %v1829 = vsel %vm1826, %v1828, %v1824
    %v1830 = vmul.f32 1.0, %v1829
    %v1831 = vrcp.pop %v1501
    %v1832 = vmul.f32 %v1501, %v1831
    %v1833 = vsub.f32 1.0, %v1832
    %v1834 = vmul.f32 %v1831, %v1833
    %v1835 = vadd.f32 %v1831, %v1834
    %vm1836 = vweird.f32 %v1501
    %vm1837 = vweird.f32 %v1831
    %vm1838 = vmor %vm1836, %vm1837
    %v1839 = vsel %vm1838, %v1831, %v1835
    %v1840 = vand.u32 2147483647, %v1501
    %vm1841 = vcmp.eq.f32.partialorder %v1840, 8.507059e+37
    %v1842 = vand.u32 %v1501, 2147483648
    %v1843 = vor.u32 1.1754944e-38, %v1842
    %v1844 = vsel %vm1841, %v1843, %v1839
    %v1845 = vmul.f32 1.0, %v1844
    %v1846 = vrcp.pop %v1502
    %v1847 = vmul.f32 %v1502, %v1846
    %v1848 = vsub.f32 1.0, %v1847
    %v1849 = vmul.f32 %v1846, %v1848
    %v1850 = vadd.f32 %v1846, %v1849
    %vm1851 = vweird.f32 %v1502
    %vm1852 = vweird.f32 %v1846
    %vm1853 = vmor %vm1851, %vm1852
    %v1854 = vsel %vm1853, %v1846, %v1850
    %v1855 = vand.u32 2147483647, %v1502
    %vm1856 = vcmp.eq.f32.partialorder %v1855, 8.507059e+37
    %v1857 = vand.u32 %v1502, 2147483648
    %v1858 = vor.u32 1.1754944e-38, %v1857
    %v1859 = vsel %vm1856, %v1858, %v1854
    %v1860 = vmul.f32 1.0, %v1859
    %v1861 = vrcp.pop %v1503
    %v1862 = vmul.f32 %v1503, %v1861
    %v1863 = vsub.f32 1.0, %v1862
    %v1864 = vmul.f32 %v1861, %v1863
    %v1865 = vadd.f32 %v1861, %v1864
    %vm1866 = vweird.f32 %v1503
    %vm1867 = vweird.f32 %v1861
    %vm1868 = vmor %vm1866, %vm1867
    %v1869 = vsel %vm1868, %v1861, %v1865
    %v1870 = vand.u32 2147483647, %v1503
    %vm1871 = vcmp.eq.f32.partialorder %v1870, 8.507059e+37
    %v1872 = vand.u32 %v1503, 2147483648
    %v1873 = vor.u32 1.1754944e-38, %v1872
    %v1874 = vsel %vm1871, %v1873, %v1869
    %v1875 = vmul.f32 1.0, %v1874
    %v1876 = vrcp.pop %v1504
    %v1877 = vmul.f32 %v1504, %v1876
    %v1878 = vsub.f32 1.0, %v1877
    %v1879 = vmul.f32 %v1876, %v1878
    %v1880 = vadd.f32 %v1876, %v1879
    %vm1881 = vweird.f32 %v1504
    %vm1882 = vweird.f32 %v1876
    %vm1883 = vmor %vm1881, %vm1882
    %v1884 = vsel %vm1883, %v1876, %v1880
    %v1885 = vand.u32 2147483647, %v1504
    %vm1886 = vcmp.eq.f32.partialorder %v1885, 8.507059e+37
    %v1887 = vand.u32 %v1504, 2147483648
    %v1888 = vor.u32 1.1754944e-38, %v1887
    %v1889 = vsel %vm1886, %v1888, %v1884
    %v1890 = vmul.f32 1.0, %v1889
    %v1891 = vrcp.pop %v1505
    %v1892 = vmul.f32 %v1505, %v1891
    %v1893 = vsub.f32 1.0, %v1892
    %v1894 = vmul.f32 %v1891, %v1893
    %v1895 = vadd.f32 %v1891, %v1894
    %vm1896 = vweird.f32 %v1505
    %vm1897 = vweird.f32 %v1891
    %vm1898 = vmor %vm1896, %vm1897
    %v1899 = vsel %vm1898, %v1891, %v1895
    %v1900 = vand.u32 2147483647, %v1505
    %vm1901 = vcmp.eq.f32.partialorder %v1900, 8.507059e+37
    %v1902 = vand.u32 %v1505, 2147483648
    %v1903 = vor.u32 1.1754944e-38, %v1902
    %v1904 = vsel %vm1901, %v1903, %v1899
    %v1905 = vmul.f32 1.0, %v1904
    %v1906 = vrcp.pop %v1506
    %v1907 = vmul.f32 %v1506, %v1906
    %v1908 = vsub.f32 1.0, %v1907
    %v1909 = vmul.f32 %v1906, %v1908
    %v1910 = vadd.f32 %v1906, %v1909
    %vm1911 = vweird.f32 %v1506
    %vm1912 = vweird.f32 %v1906
    %vm1913 = vmor %vm1911, %vm1912
    %v1914 = vsel %vm1913, %v1906, %v1910
    %v1915 = vand.u32 2147483647, %v1506
    %vm1916 = vcmp.eq.f32.partialorder %v1915, 8.507059e+37
    %v1917 = vand.u32 %v1506, 2147483648
    %v1918 = vor.u32 1.1754944e-38, %v1917
    %v1919 = vsel %vm1916, %v1918, %v1914
    %v1920 = vmul.f32 1.0, %v1919
    %v1921 = vrcp.pop %v1507
    %v1922 = vmul.f32 %v1507, %v1921
    %v1923 = vsub.f32 1.0, %v1922
    %v1924 = vmul.f32 %v1921, %v1923
    %v1925 = vadd.f32 %v1921, %v1924
    %vm1926 = vweird.f32 %v1507
    %vm1927 = vweird.f32 %v1921
    %vm1928 = vmor %vm1926, %vm1927
    %v1929 = vsel %vm1928, %v1921, %v1925
    %v1930 = vand.u32 2147483647, %v1507
    %vm1931 = vcmp.eq.f32.partialorder %v1930, 8.507059e+37
    %v1932 = vand.u32 %v1507, 2147483648
    %v1933 = vor.u32 1.1754944e-38, %v1932
    %v1934 = vsel %vm1931, %v1933, %v1929
    %v1935 = vmul.f32 1.0, %v1934
    %v1936 = vrcp.pop %v1508
    %v1937 = vmul.f32 %v1508, %v1936
    %v1938 = vsub.f32 1.0, %v1937
    %v1939 = vmul.f32 %v1936, %v1938
    %v1940 = vadd.f32 %v1936, %v1939
    %vm1941 = vweird.f32 %v1508
    %vm1942 = vweird.f32 %v1936
    %vm1943 = vmor %vm1941, %vm1942
    %v1944 = vsel %vm1943, %v1936, %v1940
    %v1945 = vand.u32 2147483647, %v1508
    %vm1946 = vcmp.eq.f32.partialorder %v1945, 8.507059e+37
    %v1947 = vand.u32 %v1508, 2147483648
    %v1948 = vor.u32 1.1754944e-38, %v1947
    %v1949 = vsel %vm1946, %v1948, %v1944
    %v1950 = vmul.f32 1.0, %v1949
    %v1951 = vrcp.pop %v1509
    %v1952 = vmul.f32 %v1509, %v1951
    %v1953 = vsub.f32 1.0, %v1952
    %v1954 = vmul.f32 %v1951, %v1953
    %v1955 = vadd.f32 %v1951, %v1954
    %vm1956 = vweird.f32 %v1509
    %vm1957 = vweird.f32 %v1951
    %vm1958 = vmor %vm1956, %vm1957
    %v1959 = vsel %vm1958, %v1951, %v1955
    %v1960 = vand.u32 2147483647, %v1509
    %vm1961 = vcmp.eq.f32.partialorder %v1960, 8.507059e+37
    %v1962 = vand.u32 %v1509, 2147483648
    %v1963 = vor.u32 1.1754944e-38, %v1962
    %v1964 = vsel %vm1961, %v1963, %v1959
    %v1965 = vmul.f32 1.0, %v1964
    %v1966 = vrcp.pop %v1510
    %v1967 = vmul.f32 %v1510, %v1966
    %v1968 = vsub.f32 1.0, %v1967
    %v1969 = vmul.f32 %v1966, %v1968
    %v1970 = vadd.f32 %v1966, %v1969
    %vm1971 = vweird.f32 %v1510
    %vm1972 = vweird.f32 %v1966
    %vm1973 = vmor %vm1971, %vm1972
    %v1974 = vsel %vm1973, %v1966, %v1970
    %v1975 = vand.u32 2147483647, %v1510
    %vm1976 = vcmp.eq.f32.partialorder %v1975, 8.507059e+37
    %v1977 = vand.u32 %v1510, 2147483648
    %v1978 = vor.u32 1.1754944e-38, %v1977
    %v1979 = vsel %vm1976, %v1978, %v1974
    %v1980 = vmul.f32 1.0, %v1979
    %v1981 = vrcp.pop %v1511
    %v1982 = vmul.f32 %v1511, %v1981
    %v1983 = vsub.f32 1.0, %v1982
    %v1984 = vmul.f32 %v1981, %v1983
    %v1985 = vadd.f32 %v1981, %v1984
    %vm1986 = vweird.f32 %v1511
    %vm1987 = vweird.f32 %v1981
    %vm1988 = vmor %vm1986, %vm1987
    %v1989 = vsel %vm1988, %v1981, %v1985
    %v1990 = vand.u32 2147483647, %v1511
    %vm1991 = vcmp.eq.f32.partialorder %v1990, 8.507059e+37
    %v1992 = vand.u32 %v1511, 2147483648
    %v1993 = vor.u32 1.1754944e-38, %v1992
    %v1994 = vsel %vm1991, %v1993, %v1989
    %v1995 = vmul.f32 1.0, %v1994
    %v1996 = vrcp.pop %v1512
    %v1997 = vmul.f32 %v1512, %v1996
    %v1998 = vsub.f32 1.0, %v1997
    %v1999 = vmul.f32 %v1996, %v1998
    %v2000 = vadd.f32 %v1996, %v1999
    %vm2001 = vweird.f32 %v1512
    %vm2002 = vweird.f32 %v1996
    %vm2003 = vmor %vm2001, %vm2002
    %v2004 = vsel %vm2003, %v1996, %v2000
    %v2005 = vand.u32 2147483647, %v1512
    %vm2006 = vcmp.eq.f32.partialorder %v2005, 8.507059e+37
    %v2007 = vand.u32 %v1512, 2147483648
    %v2008 = vor.u32 1.1754944e-38, %v2007
    %v2009 = vsel %vm2006, %v2008, %v2004
    %v2010 = vmul.f32 1.0, %v2009
    %v2011 = vrcp.pop %v1513
    %v2012 = vmul.f32 %v1513, %v2011
    %v2013 = vsub.f32 1.0, %v2012
    %v2014 = vmul.f32 %v2011, %v2013
    %v2015 = vadd.f32 %v2011, %v2014
    %vm2016 = vweird.f32 %v1513
    %vm2017 = vweird.f32 %v2011
    %vm2018 = vmor %vm2016, %vm2017
    %v2019 = vsel %vm2018, %v2011, %v2015
    %v2020 = vand.u32 2147483647, %v1513
    %vm2021 = vcmp.eq.f32.partialorder %v2020, 8.507059e+37
    %v2022 = vand.u32 %v1513, 2147483648
    %v2023 = vor.u32 1.1754944e-38, %v2022
    %v2024 = vsel %vm2021, %v2023, %v2019
    %v2025 = vmul.f32 1.0, %v2024
    %v2026 = vrcp.pop %v1514
    %v2027 = vmul.f32 %v1514, %v2026
    %v2028 = vsub.f32 1.0, %v2027
    %v2029 = vmul.f32 %v2026, %v2028
    %v2030 = vadd.f32 %v2026, %v2029
    %vm2031 = vweird.f32 %v1514
    %vm2032 = vweird.f32 %v2026
    %vm2033 = vmor %vm2031, %vm2032
    %v2034 = vsel %vm2033, %v2026, %v2030
    %v2035 = vand.u32 2147483647, %v1514
    %vm2036 = vcmp.eq.f32.partialorder %v2035, 8.507059e+37
    %v2037 = vand.u32 %v1514, 2147483648
    %v2038 = vor.u32 1.1754944e-38, %v2037
    %v2039 = vsel %vm2036, %v2038, %v2034
    %v2040 = vmul.f32 1.0, %v2039
    %v2041 = vrcp.pop %v1515
    %v2042 = vmul.f32 %v1515, %v2041
    %v2043 = vsub.f32 1.0, %v2042
    %v2044 = vmul.f32 %v2041, %v2043
    %v2045 = vadd.f32 %v2041, %v2044
    %vm2046 = vweird.f32 %v1515
    %vm2047 = vweird.f32 %v2041
    %vm2048 = vmor %vm2046, %vm2047
    %v2049 = vsel %vm2048, %v2041, %v2045
    %v2050 = vand.u32 2147483647, %v1515
    %vm2051 = vcmp.eq.f32.partialorder %v2050, 8.507059e+37
    %v2052 = vand.u32 %v1515, 2147483648
    %v2053 = vor.u32 1.1754944e-38, %v2052
    %v2054 = vsel %vm2051, %v2053, %v2049
    %v2055 = vmul.f32 1.0, %v2054
    %v2056 = vrcp.pop %v1516
    %v2057 = vmul.f32 %v1516, %v2056
    %v2058 = vsub.f32 1.0, %v2057
    %v2059 = vmul.f32 %v2056, %v2058
    %v2060 = vadd.f32 %v2056, %v2059
    %vm2061 = vweird.f32 %v1516
    %vm2062 = vweird.f32 %v2056
    %vm2063 = vmor %vm2061, %vm2062
    %v2064 = vsel %vm2063, %v2056, %v2060
    %v2065 = vand.u32 2147483647, %v1516
    %vm2066 = vcmp.eq.f32.partialorder %v2065, 8.507059e+37
    %v2067 = vand.u32 %v1516, 2147483648
    %v2068 = vor.u32 1.1754944e-38, %v2067
    %v2069 = vsel %vm2066, %v2068, %v2064
    %v2070 = vmul.f32 1.0, %v2069
    %v2071 = vrcp.pop %v1517
    %v2072 = vmul.f32 %v1517, %v2071
    %v2073 = vsub.f32 1.0, %v2072
    %v2074 = vmul.f32 %v2071, %v2073
    %v2075 = vadd.f32 %v2071, %v2074
    %vm2076 = vweird.f32 %v1517
    %vm2077 = vweird.f32 %v2071
    %vm2078 = vmor %vm2076, %vm2077
    %v2079 = vsel %vm2078, %v2071, %v2075
    %v2080 = vand.u32 2147483647, %v1517
    %vm2081 = vcmp.eq.f32.partialorder %v2080, 8.507059e+37
    %v2082 = vand.u32 %v1517, 2147483648
    %v2083 = vor.u32 1.1754944e-38, %v2082
    %v2084 = vsel %vm2081, %v2083, %v2079
    %v2085 = vmul.f32 1.0, %v2084
    %v2086 = vrcp.pop %v1518
    %v2087 = vmul.f32 %v1518, %v2086
    %v2088 = vsub.f32 1.0, %v2087
    %v2089 = vmul.f32 %v2086, %v2088
    %v2090 = vadd.f32 %v2086, %v2089
    %vm2091 = vweird.f32 %v1518
    %vm2092 = vweird.f32 %v2086
    %vm2093 = vmor %vm2091, %vm2092
    %v2094 = vsel %vm2093, %v2086, %v2090
    %v2095 = vand.u32 2147483647, %v1518
    %vm2096 = vcmp.eq.f32.partialorder %v2095, 8.507059e+37
    %v2097 = vand.u32 %v1518, 2147483648
    %v2098 = vor.u32 1.1754944e-38, %v2097
    %v2099 = vsel %vm2096, %v2098, %v2094
    %v2100 = vmul.f32 1.0, %v2099
    %v2101 = vrcp.pop %v1519
    %v2102 = vmul.f32 %v1519, %v2101
    %v2103 = vsub.f32 1.0, %v2102
    %v2104 = vmul.f32 %v2101, %v2103
    %v2105 = vadd.f32 %v2101, %v2104
    %vm2106 = vweird.f32 %v1519
    %vm2107 = vweird.f32 %v2101
    %vm2108 = vmor %vm2106, %vm2107
    %v2109 = vsel %vm2108, %v2101, %v2105
    %v2110 = vand.u32 2147483647, %v1519
    %vm2111 = vcmp.eq.f32.partialorder %v2110, 8.507059e+37
    %v2112 = vand.u32 %v1519, 2147483648
    %v2113 = vor.u32 1.1754944e-38, %v2112
    %v2114 = vsel %vm2111, %v2113, %v2109
    %v2115 = vmul.f32 1.0, %v2114
    %v2116 = vrcp.pop %v1520
    %v2117 = vmul.f32 %v1520, %v2116
    %v2118 = vsub.f32 1.0, %v2117
    %v2119 = vmul.f32 %v2116, %v2118
    %v2120 = vadd.f32 %v2116, %v2119
    %vm2121 = vweird.f32 %v1520
    %vm2122 = vweird.f32 %v2116
    %vm2123 = vmor %vm2121, %vm2122
    %v2124 = vsel %vm2123, %v2116, %v2120
    %v2125 = vand.u32 2147483647, %v1520
    %vm2126 = vcmp.eq.f32.partialorder %v2125, 8.507059e+37
    %v2127 = vand.u32 %v1520, 2147483648
    %v2128 = vor.u32 1.1754944e-38, %v2127
    %v2129 = vsel %vm2126, %v2128, %v2124
    %v2130 = vmul.f32 1.0, %v2129
    %v2131 = vrcp.pop %v1521
    %v2132 = vmul.f32 %v1521, %v2131
    %v2133 = vsub.f32 1.0, %v2132
    %v2134 = vmul.f32 %v2131, %v2133
    %v2135 = vadd.f32 %v2131, %v2134
    %vm2136 = vweird.f32 %v1521
    %vm2137 = vweird.f32 %v2131
    %vm2138 = vmor %vm2136, %vm2137
    %v2139 = vsel %vm2138, %v2131, %v2135
    %v2140 = vand.u32 2147483647, %v1521
    %vm2141 = vcmp.eq.f32.partialorder %v2140, 8.507059e+37
    %v2142 = vand.u32 %v1521, 2147483648
    %v2143 = vor.u32 1.1754944e-38, %v2142
    %v2144 = vsel %vm2141, %v2143, %v2139
    %v2145 = vmul.f32 1.0, %v2144
    %v2146 = vrcp.pop %v1522
    %v2147 = vmul.f32 %v1522, %v2146
    %v2148 = vsub.f32 1.0, %v2147
    %v2149 = vmul.f32 %v2146, %v2148
    %v2150 = vadd.f32 %v2146, %v2149
    %vm2151 = vweird.f32 %v1522
    %vm2152 = vweird.f32 %v2146
    %vm2153 = vmor %vm2151, %vm2152
    %v2154 = vsel %vm2153, %v2146, %v2150
    %v2155 = vand.u32 2147483647, %v1522
    %vm2156 = vcmp.eq.f32.partialorder %v2155, 8.507059e+37
    %v2157 = vand.u32 %v1522, 2147483648
    %v2158 = vor.u32 1.1754944e-38, %v2157
    %v2159 = vsel %vm2156, %v2158, %v2154
    %v2160 = vmul.f32 1.0, %v2159
    %v2161 = vrcp.pop %v1523
    %v2162 = vmul.f32 %v1523, %v2161
    %v2163 = vsub.f32 1.0, %v2162
    %v2164 = vmul.f32 %v2161, %v2163
    %v2165 = vadd.f32 %v2161, %v2164
    %vm2166 = vweird.f32 %v1523
    %vm2167 = vweird.f32 %v2161
    %vm2168 = vmor %vm2166, %vm2167
    %v2169 = vsel %vm2168, %v2161, %v2165
    %v2170 = vand.u32 2147483647, %v1523
    %vm2171 = vcmp.eq.f32.partialorder %v2170, 8.507059e+37
    %v2172 = vand.u32 %v1523, 2147483648
    %v2173 = vor.u32 1.1754944e-38, %v2172
    %v2174 = vsel %vm2171, %v2173, %v2169
    %v2175 = vmul.f32 1.0, %v2174
    %v2176 = vrcp.pop %v1524
    %v2177 = vmul.f32 %v1524, %v2176
    %v2178 = vsub.f32 1.0, %v2177
    %v2179 = vmul.f32 %v2176, %v2178
    %v2180 = vadd.f32 %v2176, %v2179
    %vm2181 = vweird.f32 %v1524
    %vm2182 = vweird.f32 %v2176
    %vm2183 = vmor %vm2181, %vm2182
    %v2184 = vsel %vm2183, %v2176, %v2180
    %v2185 = vand.u32 2147483647, %v1524
    %vm2186 = vcmp.eq.f32.partialorder %v2185, 8.507059e+37
    %v2187 = vand.u32 %v1524, 2147483648
    %v2188 = vor.u32 1.1754944e-38, %v2187
    %v2189 = vsel %vm2186, %v2188, %v2184
    %v2190 = vmul.f32 1.0, %v2189
    %v2191 = vrcp.pop %v1525
    %v2192 = vmul.f32 %v1525, %v2191
    %v2193 = vsub.f32 1.0, %v2192
    %v2194 = vmul.f32 %v2191, %v2193
    %v2195 = vadd.f32 %v2191, %v2194
    %vm2196 = vweird.f32 %v1525
    %vm2197 = vweird.f32 %v2191
    %vm2198 = vmor %vm2196, %vm2197
    %v2199 = vsel %vm2198, %v2191, %v2195
    %v2200 = vand.u32 2147483647, %v1525
    %vm2201 = vcmp.eq.f32.partialorder %v2200, 8.507059e+37
    %v2202 = vand.u32 %v1525, 2147483648
    %v2203 = vor.u32 1.1754944e-38, %v2202
    %v2204 = vsel %vm2201, %v2203, %v2199
    %v2205 = vmul.f32 1.0, %v2204
    %v2206 = vrcp.pop %v1526
    %v2207 = vmul.f32 %v1526, %v2206
    %v2208 = vsub.f32 1.0, %v2207
    %v2209 = vmul.f32 %v2206, %v2208
    %v2210 = vadd.f32 %v2206, %v2209
    %vm2211 = vweird.f32 %v1526
    %vm2212 = vweird.f32 %v2206
    %vm2213 = vmor %vm2211, %vm2212
    %v2214 = vsel %vm2213, %v2206, %v2210
    %v2215 = vand.u32 2147483647, %v1526
    %vm2216 = vcmp.eq.f32.partialorder %v2215, 8.507059e+37
    %v2217 = vand.u32 %v1526, 2147483648
    %v2218 = vor.u32 1.1754944e-38, %v2217
    %v2219 = vsel %vm2216, %v2218, %v2214
    %v2220 = vmul.f32 1.0, %v2219
    %v2221 = vrcp.pop %v1527
    %v2222 = vmul.f32 %v1527, %v2221
    %v2223 = vsub.f32 1.0, %v2222
    %v2224 = vmul.f32 %v2221, %v2223
    %v2225 = vadd.f32 %v2221, %v2224
    %vm2226 = vweird.f32 %v1527
    %vm2227 = vweird.f32 %v2221
    %vm2228 = vmor %vm2226, %vm2227
    %v2229 = vsel %vm2228, %v2221, %v2225
    %v2230 = vand.u32 2147483647, %v1527
    %vm2231 = vcmp.eq.f32.partialorder %v2230, 8.507059e+37
    %v2232 = vand.u32 %v1527, 2147483648
    %v2233 = vor.u32 1.1754944e-38, %v2232
    %v2234 = vsel %vm2231, %v2233, %v2229
    %v2235 = vmul.f32 1.0, %v2234
    %v2236 = vrcp.pop %v1528
    %v2237 = vmul.f32 %v1528, %v2236
    %v2238 = vsub.f32 1.0, %v2237
    %v2239 = vmul.f32 %v2236, %v2238
    %v2240 = vadd.f32 %v2236, %v2239
    %vm2241 = vweird.f32 %v1528
    %vm2242 = vweird.f32 %v2236
    %vm2243 = vmor %vm2241, %vm2242
    %v2244 = vsel %vm2243, %v2236, %v2240
    %v2245 = vand.u32 2147483647, %v1528
    %vm2246 = vcmp.eq.f32.partialorder %v2245, 8.507059e+37
    %v2247 = vand.u32 %v1528, 2147483648
    %v2248 = vor.u32 1.1754944e-38, %v2247
    %v2249 = vsel %vm2246, %v2248, %v2244
    %v2250 = vmul.f32 1.0, %v2249
    %v2251 = vrcp.pop %v1529
    %v2252 = vmul.f32 %v1529, %v2251
    %v2253 = vsub.f32 1.0, %v2252
    %v2254 = vmul.f32 %v2251, %v2253
    %v2255 = vadd.f32 %v2251, %v2254
    %vm2256 = vweird.f32 %v1529
    %vm2257 = vweird.f32 %v2251
    %vm2258 = vmor %vm2256, %vm2257
    %v2259 = vsel %vm2258, %v2251, %v2255
    %v2260 = vand.u32 2147483647, %v1529
    %vm2261 = vcmp.eq.f32.partialorder %v2260, 8.507059e+37
    %v2262 = vand.u32 %v1529, 2147483648
    %v2263 = vor.u32 1.1754944e-38, %v2262
    %v2264 = vsel %vm2261, %v2263, %v2259
    %v2265 = vmul.f32 1.0, %v2264
    %v2266 = vrcp.pop %v1530
    %v2267 = vmul.f32 %v1530, %v2266
    %v2268 = vsub.f32 1.0, %v2267
    %v2269 = vmul.f32 %v2266, %v2268
    %v2270 = vadd.f32 %v2266, %v2269
    %vm2271 = vweird.f32 %v1530
    %vm2272 = vweird.f32 %v2266
    %vm2273 = vmor %vm2271, %vm2272
    %v2274 = vsel %vm2273, %v2266, %v2270
    %v2275 = vand.u32 2147483647, %v1530
    %vm2276 = vcmp.eq.f32.partialorder %v2275, 8.507059e+37
    %v2277 = vand.u32 %v1530, 2147483648
    %v2278 = vor.u32 1.1754944e-38, %v2277
    %v2279 = vsel %vm2276, %v2278, %v2274
    %v2280 = vmul.f32 1.0, %v2279
    %v2281 = vrcp.pop %v1531
    %v2282 = vmul.f32 %v1531, %v2281
    %v2283 = vsub.f32 1.0, %v2282
    %v2284 = vmul.f32 %v2281, %v2283
    %v2285 = vadd.f32 %v2281, %v2284
    %vm2286 = vweird.f32 %v1531
    %vm2287 = vweird.f32 %v2281
    %vm2288 = vmor %vm2286, %vm2287
    %v2289 = vsel %vm2288, %v2281, %v2285
    %v2290 = vand.u32 2147483647, %v1531
    %vm2291 = vcmp.eq.f32.partialorder %v2290, 8.507059e+37
    %v2292 = vand.u32 %v1531, 2147483648
    %v2293 = vor.u32 1.1754944e-38, %v2292
    %v2294 = vsel %vm2291, %v2293, %v2289
    %v2295 = vmul.f32 1.0, %v2294
    %v2296 = vrcp.pop %v1532
    %v2297 = vmul.f32 %v1532, %v2296
    %v2298 = vsub.f32 1.0, %v2297
    %v2299 = vmul.f32 %v2296, %v2298
    %v2300 = vadd.f32 %v2296, %v2299
    %vm2301 = vweird.f32 %v1532
    %vm2302 = vweird.f32 %v2296
    %vm2303 = vmor %vm2301, %vm2302
    %v2304 = vsel %vm2303, %v2296, %v2300
    %v2305 = vand.u32 2147483647, %v1532
    %vm2306 = vcmp.eq.f32.partialorder %v2305, 8.507059e+37
    %v2307 = vand.u32 %v1532, 2147483648
    %v2308 = vor.u32 1.1754944e-38, %v2307
    %v2309 = vsel %vm2306, %v2308, %v2304
    %v2310 = vmul.f32 1.0, %v2309
    %v2311 = vrcp.pop %v1533
    %v2312 = vmul.f32 %v1533, %v2311
    %v2313 = vsub.f32 1.0, %v2312
    %v2314 = vmul.f32 %v2311, %v2313
    %v2315 = vadd.f32 %v2311, %v2314
    %vm2316 = vweird.f32 %v1533
    %vm2317 = vweird.f32 %v2311
    %vm2318 = vmor %vm2316, %vm2317
    %v2319 = vsel %vm2318, %v2311, %v2315
    %v2320 = vand.u32 2147483647, %v1533
    %vm2321 = vcmp.eq.f32.partialorder %v2320, 8.507059e+37
    %v2322 = vand.u32 %v1533, 2147483648
    %v2323 = vor.u32 1.1754944e-38, %v2322
    %v2324 = vsel %vm2321, %v2323, %v2319
    %v2325 = vmul.f32 1.0, %v2324
    %v2326 = vrcp.pop %v1534
    %v2327 = vmul.f32 %v1534, %v2326
    %v2328 = vsub.f32 1.0, %v2327
    %v2329 = vmul.f32 %v2326, %v2328
    %v2330 = vadd.f32 %v2326, %v2329
    %vm2331 = vweird.f32 %v1534
    %vm2332 = vweird.f32 %v2326
    %vm2333 = vmor %vm2331, %vm2332
    %v2334 = vsel %vm2333, %v2326, %v2330
    %v2335 = vand.u32 2147483647, %v1534
    %vm2336 = vcmp.eq.f32.partialorder %v2335, 8.507059e+37
    %v2337 = vand.u32 %v1534, 2147483648
    %v2338 = vor.u32 1.1754944e-38, %v2337
    %v2339 = vsel %vm2336, %v2338, %v2334
    %v2340 = vmul.f32 1.0, %v2339
    %v2341 = vrcp.pop %v1535
    %v2342 = vmul.f32 %v1535, %v2341
    %v2343 = vsub.f32 1.0, %v2342
    %v2344 = vmul.f32 %v2341, %v2343
    %v2345 = vadd.f32 %v2341, %v2344
    %vm2346 = vweird.f32 %v1535
    %vm2347 = vweird.f32 %v2341
    %vm2348 = vmor %vm2346, %vm2347
    %v2349 = vsel %vm2348, %v2341, %v2345
    %v2350 = vand.u32 2147483647, %v1535
    %vm2351 = vcmp.eq.f32.partialorder %v2350, 8.507059e+37
    %v2352 = vand.u32 %v1535, 2147483648
    %v2353 = vor.u32 1.1754944e-38, %v2352
    %v2354 = vsel %vm2351, %v2353, %v2349
    %v2355 = vmul.f32 1.0, %v2354
    %v2356 = vrcp.pop %v1536
    %v2357 = vmul.f32 %v1536, %v2356
    %v2358 = vsub.f32 1.0, %v2357
    %v2359 = vmul.f32 %v2356, %v2358
    %v2360 = vadd.f32 %v2356, %v2359
    %vm2361 = vweird.f32 %v1536
    %vm2362 = vweird.f32 %v2356
    %vm2363 = vmor %vm2361, %vm2362
    %v2364 = vsel %vm2363, %v2356, %v2360
    %v2365 = vand.u32 2147483647, %v1536
    %vm2366 = vcmp.eq.f32.partialorder %v2365, 8.507059e+37
    %v2367 = vand.u32 %v1536, 2147483648
    %v2368 = vor.u32 1.1754944e-38, %v2367
    %v2369 = vsel %vm2366, %v2368, %v2364
    %v2370 = vmul.f32 1.0, %v2369
    %v2371 = vrcp.pop %v1537
    %v2372 = vmul.f32 %v1537, %v2371
    %v2373 = vsub.f32 1.0, %v2372
    %v2374 = vmul.f32 %v2371, %v2373
    %v2375 = vadd.f32 %v2371, %v2374
    %vm2376 = vweird.f32 %v1537
    %vm2377 = vweird.f32 %v2371
    %vm2378 = vmor %vm2376, %vm2377
    %v2379 = vsel %vm2378, %v2371, %v2375
    %v2380 = vand.u32 2147483647, %v1537
    %vm2381 = vcmp.eq.f32.partialorder %v2380, 8.507059e+37
    %v2382 = vand.u32 %v1537, 2147483648
    %v2383 = vor.u32 1.1754944e-38, %v2382
    %v2384 = vsel %vm2381, %v2383, %v2379
    %v2385 = vmul.f32 1.0, %v2384
    %v2386 = vrcp.pop %v1538
    %v2387 = vmul.f32 %v1538, %v2386
    %v2388 = vsub.f32 1.0, %v2387
    %v2389 = vmul.f32 %v2386, %v2388
    %v2390 = vadd.f32 %v2386, %v2389
    %vm2391 = vweird.f32 %v1538
    %vm2392 = vweird.f32 %v2386
    %vm2393 = vmor %vm2391, %vm2392
    %v2394 = vsel %vm2393, %v2386, %v2390
    %v2395 = vand.u32 2147483647, %v1538
    %vm2396 = vcmp.eq.f32.partialorder %v2395, 8.507059e+37
    %v2397 = vand.u32 %v1538, 2147483648
    %v2398 = vor.u32 1.1754944e-38, %v2397
    %v2399 = vsel %vm2396, %v2398, %v2394
    %v2400 = vmul.f32 1.0, %v2399
    %v2401 = vrcp.pop %v1539
    %v2402 = vmul.f32 %v1539, %v2401
    %v2403 = vsub.f32 1.0, %v2402
    %v2404 = vmul.f32 %v2401, %v2403
    %v2405 = vadd.f32 %v2401, %v2404
    %vm2406 = vweird.f32 %v1539
    %vm2407 = vweird.f32 %v2401
    %vm2408 = vmor %vm2406, %vm2407
    %v2409 = vsel %vm2408, %v2401, %v2405
    %v2410 = vand.u32 2147483647, %v1539
    %vm2411 = vcmp.eq.f32.partialorder %v2410, 8.507059e+37
    %v2412 = vand.u32 %v1539, 2147483648
    %v2413 = vor.u32 1.1754944e-38, %v2412
    %v2414 = vsel %vm2411, %v2413, %v2409
    %v2415 = vmul.f32 1.0, %v2414
    %v2416 = vrcp.pop %v1540
    %v2417 = vmul.f32 %v1540, %v2416
    %v2418 = vsub.f32 1.0, %v2417
    %v2419 = vmul.f32 %v2416, %v2418
    %v2420 = vadd.f32 %v2416, %v2419
    %vm2421 = vweird.f32 %v1540
    %vm2422 = vweird.f32 %v2416
    %vm2423 = vmor %vm2421, %vm2422
    %v2424 = vsel %vm2423, %v2416, %v2420
    %v2425 = vand.u32 2147483647, %v1540
    %vm2426 = vcmp.eq.f32.partialorder %v2425, 8.507059e+37
    %v2427 = vand.u32 %v1540, 2147483648
    %v2428 = vor.u32 1.1754944e-38, %v2427
    %v2429 = vsel %vm2426, %v2428, %v2424
    %v2430 = vmul.f32 1.0, %v2429
    %v2431 = vrcp.pop %v1541
    %v2432 = vmul.f32 %v1541, %v2431
    %v2433 = vsub.f32 1.0, %v2432
    %v2434 = vmul.f32 %v2431, %v2433
    %v2435 = vadd.f32 %v2431, %v2434
    %vm2436 = vweird.f32 %v1541
    %vm2437 = vweird.f32 %v2431
    %vm2438 = vmor %vm2436, %vm2437
    %v2439 = vsel %vm2438, %v2431, %v2435
    %v2440 = vand.u32 2147483647, %v1541
    %vm2441 = vcmp.eq.f32.partialorder %v2440, 8.507059e+37
    %v2442 = vand.u32 %v1541, 2147483648
    %v2443 = vor.u32 1.1754944e-38, %v2442
    %v2444 = vsel %vm2441, %v2443, %v2439
    %v2445 = vmul.f32 1.0, %v2444
    %v2446 = vrcp.pop %v1542
    %v2447 = vmul.f32 %v1542, %v2446
    %v2448 = vsub.f32 1.0, %v2447
    %v2449 = vmul.f32 %v2446, %v2448
    %v2450 = vadd.f32 %v2446, %v2449
    %vm2451 = vweird.f32 %v1542
    %vm2452 = vweird.f32 %v2446
    %vm2453 = vmor %vm2451, %vm2452
    %v2454 = vsel %vm2453, %v2446, %v2450
    %v2455 = vand.u32 2147483647, %v1542
    %vm2456 = vcmp.eq.f32.partialorder %v2455, 8.507059e+37
    %v2457 = vand.u32 %v1542, 2147483648
    %v2458 = vor.u32 1.1754944e-38, %v2457
    %v2459 = vsel %vm2456, %v2458, %v2454
    %v2460 = vmul.f32 1.0, %v2459
    %v2461 = vrcp.pop %v1543
    %v2462 = vmul.f32 %v1543, %v2461
    %v2463 = vsub.f32 1.0, %v2462
    %v2464 = vmul.f32 %v2461, %v2463
    %v2465 = vadd.f32 %v2461, %v2464
    %vm2466 = vweird.f32 %v1543
    %vm2467 = vweird.f32 %v2461
    %vm2468 = vmor %vm2466, %vm2467
    %v2469 = vsel %vm2468, %v2461, %v2465
    %v2470 = vand.u32 2147483647, %v1543
    %vm2471 = vcmp.eq.f32.partialorder %v2470, 8.507059e+37
    %v2472 = vand.u32 %v1543, 2147483648
    %v2473 = vor.u32 1.1754944e-38, %v2472
    %v2474 = vsel %vm2471, %v2473, %v2469
    %v2475 = vmul.f32 1.0, %v2474
    %v2476 = vrcp.pop %v1544
    %v2477 = vmul.f32 %v1544, %v2476
    %v2478 = vsub.f32 1.0, %v2477
    %v2479 = vmul.f32 %v2476, %v2478
    %v2480 = vadd.f32 %v2476, %v2479
    %vm2481 = vweird.f32 %v1544
    %vm2482 = vweird.f32 %v2476
    %vm2483 = vmor %vm2481, %vm2482
    %v2484 = vsel %vm2483, %v2476, %v2480
    %v2485 = vand.u32 2147483647, %v1544
    %vm2486 = vcmp.eq.f32.partialorder %v2485, 8.507059e+37
    %v2487 = vand.u32 %v1544, 2147483648
    %v2488 = vor.u32 1.1754944e-38, %v2487
    %v2489 = vsel %vm2486, %v2488, %v2484
    %v2490 = vmul.f32 1.0, %v2489
    %v2491 = vrcp.pop %v1545
    %v2492 = vmul.f32 %v1545, %v2491
    %v2493 = vsub.f32 1.0, %v2492
    %v2494 = vmul.f32 %v2491, %v2493
    %v2495 = vadd.f32 %v2491, %v2494
    %vm2496 = vweird.f32 %v1545
    %vm2497 = vweird.f32 %v2491
    %vm2498 = vmor %vm2496, %vm2497
    %v2499 = vsel %vm2498, %v2491, %v2495
    %v2500 = vand.u32 2147483647, %v1545
    %vm2501 = vcmp.eq.f32.partialorder %v2500, 8.507059e+37
    %v2502 = vand.u32 %v1545, 2147483648
    %v2503 = vor.u32 1.1754944e-38, %v2502
    %v2504 = vsel %vm2501, %v2503, %v2499
    %v2505 = vmul.f32 1.0, %v2504
    %v2506 = vstv %s44
    %v2507 = vmul.f32 %v2506, %v1560
    %v2508 = vmul.f32 %v2506, %v1575
    %v2509 = vmul.f32 %v2506, %v1590
    %v2510 = vmul.f32 %v2506, %v1605
    %v2511 = vmul.f32 %v2506, %v1620
    %v2512 = vmul.f32 %v2506, %v1635
    %v2513 = vmul.f32 %v2506, %v1650
    %v2514 = vmul.f32 %v2506, %v1665
    %v2515 = vmul.f32 %v2506, %v1680
    %v2516 = vmul.f32 %v2506, %v1695
    %v2517 = vmul.f32 %v2506, %v1710
    %v2518 = vmul.f32 %v2506, %v1725
    %v2519 = vmul.f32 %v2506, %v1740
    %v2520 = vmul.f32 %v2506, %v1755
    %v2521 = vmul.f32 %v2506, %v1770
    %v2522 = vmul.f32 %v2506, %v1785
    %v2523 = vmul.f32 %v2506, %v1800
    %v2524 = vmul.f32 %v2506, %v1815
    %v2525 = vmul.f32 %v2506, %v1830
    %v2526 = vmul.f32 %v2506, %v1845
    %v2527 = vmul.f32 %v2506, %v1860
    %v2528 = vmul.f32 %v2506, %v1875
    %v2529 = vmul.f32 %v2506, %v1890
    %v2530 = vmul.f32 %v2506, %v1905
    %v2531 = vmul.f32 %v2506, %v1920
    %v2532 = vmul.f32 %v2506, %v1935
    %v2533 = vmul.f32 %v2506, %v1950
    %v2534 = vmul.f32 %v2506, %v1965
    %v2535 = vmul.f32 %v2506, %v1980
    %v2536 = vmul.f32 %v2506, %v1995
    %v2537 = vmul.f32 %v2506, %v2010
    %v2538 = vmul.f32 %v2506, %v2025
    %v2539 = vmul.f32 %v2506, %v2040
    %v2540 = vmul.f32 %v2506, %v2055
    %v2541 = vmul.f32 %v2506, %v2070
    %v2542 = vmul.f32 %v2506, %v2085
    %v2543 = vmul.f32 %v2506, %v2100
    %v2544 = vmul.f32 %v2506, %v2115
    %v2545 = vmul.f32 %v2506, %v2130
    %v2546 = vmul.f32 %v2506, %v2145
    %v2547 = vmul.f32 %v2506, %v2160
    %v2548 = vmul.f32 %v2506, %v2175
    %v2549 = vmul.f32 %v2506, %v2190
    %v2550 = vmul.f32 %v2506, %v2205
    %v2551 = vmul.f32 %v2506, %v2220
    %v2552 = vmul.f32 %v2506, %v2235
    %v2553 = vmul.f32 %v2506, %v2250
    %v2554 = vmul.f32 %v2506, %v2265
    %v2555 = vmul.f32 %v2506, %v2280
    %v2556 = vmul.f32 %v2506, %v2295
    %v2557 = vmul.f32 %v2506, %v2310
    %v2558 = vmul.f32 %v2506, %v2325
    %v2559 = vmul.f32 %v2506, %v2340
    %v2560 = vmul.f32 %v2506, %v2355
    %v2561 = vmul.f32 %v2506, %v2370
    %v2562 = vmul.f32 %v2506, %v2385
    %v2563 = vmul.f32 %v2506, %v2400
    %v2564 = vmul.f32 %v2506, %v2415
    %v2565 = vmul.f32 %v2506, %v2430
    %v2566 = vmul.f32 %v2506, %v2445
    %v2567 = vmul.f32 %v2506, %v2460
    %v2568 = vmul.f32 %v2506, %v2475
    %v2569 = vmul.f32 %v2506, %v2490
    %v2570 = vmul.f32 %v2506, %v2505
    %v2571 = vstv %s42
    %v2572 = vadd.f32 %v2571, %v2507
    %v2573 = vadd.f32 %v2571, %v2508
    %v2574 = vadd.f32 %v2571, %v2509
    %v2575 = vadd.f32 %v2571, %v2510
    %v2576 = vadd.f32 %v2571, %v2511
    %v2577 = vadd.f32 %v2571, %v2512
    %v2578 = vadd.f32 %v2571, %v2513
    %v2579 = vadd.f32 %v2571, %v2514
    %v2580 = vadd.f32 %v2571, %v2515
    %v2581 = vadd.f32 %v2571, %v2516
    %v2582 = vadd.f32 %v2571, %v2517
    %v2583 = vadd.f32 %v2571, %v2518
    %v2584 = vadd.f32 %v2571, %v2519
    %v2585 = vadd.f32 %v2571, %v2520
    %v2586 = vadd.f32 %v2571, %v2521
    %v2587 = vadd.f32 %v2571, %v2522
    %v2588 = vadd.f32 %v2571, %v2523
    %v2589 = vadd.f32 %v2571, %v2524
    %v2590 = vadd.f32 %v2571, %v2525
    %v2591 = vadd.f32 %v2571, %v2526
    %v2592 = vadd.f32 %v2571, %v2527
    %v2593 = vadd.f32 %v2571, %v2528
    %v2594 = vadd.f32 %v2571, %v2529
    %v2595 = vadd.f32 %v2571, %v2530
    %v2596 = vadd.f32 %v2571, %v2531
    %v2597 = vadd.f32 %v2571, %v2532
    %v2598 = vadd.f32 %v2571, %v2533
    %v2599 = vadd.f32 %v2571, %v2534
    %v2600 = vadd.f32 %v2571, %v2535
    %v2601 = vadd.f32 %v2571, %v2536
    %v2602 = vadd.f32 %v2571, %v2537
    %v2603 = vadd.f32 %v2571, %v2538
    %v2604 = vadd.f32 %v2571, %v2539
    %v2605 = vadd.f32 %v2571, %v2540
    %v2606 = vadd.f32 %v2571, %v2541
    %v2607 = vadd.f32 %v2571, %v2542
    %v2608 = vadd.f32 %v2571, %v2543
    %v2609 = vadd.f32 %v2571, %v2544
    %v2610 = vadd.f32 %v2571, %v2545
    %v2611 = vadd.f32 %v2571, %v2546
    %v2612 = vadd.f32 %v2571, %v2547
    %v2613 = vadd.f32 %v2571, %v2548
    %v2614 = vadd.f32 %v2571, %v2549
    %v2615 = vadd.f32 %v2571, %v2550
    %v2616 = vadd.f32 %v2571, %v2551
    %v2617 = vadd.f32 %v2571, %v2552
    %v2618 = vadd.f32 %v2571, %v2553
    %v2619 = vadd.f32 %v2571, %v2554
    %v2620 = vadd.f32 %v2571, %v2555
    %v2621 = vadd.f32 %v2571, %v2556
    %v2622 = vadd.f32 %v2571, %v2557
    %v2623 = vadd.f32 %v2571, %v2558
    %v2624 = vadd.f32 %v2571, %v2559
    %v2625 = vadd.f32 %v2571, %v2560
    %v2626 = vadd.f32 %v2571, %v2561
    %v2627 = vadd.f32 %v2571, %v2562
    %v2628 = vadd.f32 %v2571, %v2563
    %v2629 = vadd.f32 %v2571, %v2564
    %v2630 = vadd.f32 %v2571, %v2565
    %v2631 = vadd.f32 %v2571, %v2566
    %v2632 = vadd.f32 %v2571, %v2567
    %v2633 = vadd.f32 %v2571, %v2568
    %v2634 = vadd.f32 %v2571, %v2569
    %v2635 = vadd.f32 %v2571, %v2570
    %vm2636 = vcmask 31744
    %2637 = vst.msk [vmem:[%s8] sm:$0xff] %vm2636, %v2572
    %2638 = vst.msk [vmem:[%s8 + $0x8] sm:$0xff] %vm2636, %v2573
    %2639 = vst.msk [vmem:[%s8 + $0x10] sm:$0xff] %vm2636, %v2574
    %2640 = vst.msk [vmem:[%s8 + $0x18] sm:$0xff] %vm2636, %v2575
    %2641 = vst.msk [vmem:[%s8 + $0x20] sm:$0xff] %vm2636, %v2576
    %2642 = vst.msk [vmem:[%s8 + $0x28] sm:$0xff] %vm2636, %v2577
    %2643 = vst.msk [vmem:[%s8 + $0x30] sm:$0xff] %vm2636, %v2578
    %2644 = vst.msk [vmem:[%s8 + $0x38] sm:$0xff] %vm2636, %v2579
    %2645 = vst.msk [vmem:[%s8 + $0x40] sm:$0xff] %vm2636, %v2580
    %2646 = vst.msk [vmem:[%s8 + $0x48] sm:$0xff] %vm2636, %v2581
    %2647 = vst.msk [vmem:[%s8 + $0x50] sm:$0xff] %vm2636, %v2582
    %2648 = vst.msk [vmem:[%s8 + $0x58] sm:$0xff] %vm2636, %v2583
    %2649 = vst.msk [vmem:[%s8 + $0x60] sm:$0xff] %vm2636, %v2584
    %2650 = vst.msk [vmem:[%s8 + $0x68] sm:$0xff] %vm2636, %v2585
    %2651 = vst.msk [vmem:[%s8 + $0x70] sm:$0xff] %vm2636, %v2586
    %2652 = vst.msk [vmem:[%s8 + $0x78] sm:$0xff] %vm2636, %v2587
    %2653 = vst.msk [vmem:[%s8 + $0x80] sm:$0xff] %vm2636, %v2588
    %2654 = vst.msk [vmem:[%s8 + $0x88] sm:$0xff] %vm2636, %v2589
    %2655 = vst.msk [vmem:[%s8 + $0x90] sm:$0xff] %vm2636, %v2590
    %2656 = vst.msk [vmem:[%s8 + $0x98] sm:$0xff] %vm2636, %v2591
    %2657 = vst.msk [vmem:[%s8 + $0xa0] sm:$0xff] %vm2636, %v2592
    %2658 = vst.msk [vmem:[%s8 + $0xa8] sm:$0xff] %vm2636, %v2593
    %2659 = vst.msk [vmem:[%s8 + $0xb0] sm:$0xff] %vm2636, %v2594
    %2660 = vst.msk [vmem:[%s8 + $0xb8] sm:$0xff] %vm2636, %v2595
    %2661 = vst.msk [vmem:[%s8 + $0xc0] sm:$0xff] %vm2636, %v2596
    %2662 = vst.msk [vmem:[%s8 + $0xc8] sm:$0xff] %vm2636, %v2597
    %2663 = vst.msk [vmem:[%s8 + $0xd0] sm:$0xff] %vm2636, %v2598
    %2664 = vst.msk [vmem:[%s8 + $0xd8] sm:$0xff] %vm2636, %v2599
    %2665 = vst.msk [vmem:[%s8 + $0xe0] sm:$0xff] %vm2636, %v2600
    %2666 = vst.msk [vmem:[%s8 + $0xe8] sm:$0xff] %vm2636, %v2601
    %2667 = vst.msk [vmem:[%s8 + $0xf0] sm:$0xff] %vm2636, %v2602
    %2668 = vst.msk [vmem:[%s8 + $0xf8] sm:$0xff] %vm2636, %v2603
    %2669 = vst.msk [vmem:[%s8 + $0x100] sm:$0xff] %vm2636, %v2604
    %2670 = vst.msk [vmem:[%s8 + $0x108] sm:$0xff] %vm2636, %v2605
    %2671 = vst.msk [vmem:[%s8 + $0x110] sm:$0xff] %vm2636, %v2606
    %2672 = vst.msk [vmem:[%s8 + $0x118] sm:$0xff] %vm2636, %v2607
    %2673 = vst.msk [vmem:[%s8 + $0x120] sm:$0xff] %vm2636, %v2608
    %2674 = vst.msk [vmem:[%s8 + $0x128] sm:$0xff] %vm2636, %v2609
    %2675 = vst.msk [vmem:[%s8 + $0x130] sm:$0xff] %vm2636, %v2610
    %2676 = vst.msk [vmem:[%s8 + $0x138] sm:$0xff] %vm2636, %v2611
    %2677 = vst.msk [vmem:[%s8 + $0x140] sm:$0xff] %vm2636, %v2612
    %2678 = vst.msk [vmem:[%s8 + $0x148] sm:$0xff] %vm2636, %v2613
    %2679 = vst.msk [vmem:[%s8 + $0x150] sm:$0xff] %vm2636, %v2614
    %2680 = vst.msk [vmem:[%s8 + $0x158] sm:$0xff] %vm2636, %v2615
    %2681 = vst.msk [vmem:[%s8 + $0x160] sm:$0xff] %vm2636, %v2616
    %2682 = vst.msk [vmem:[%s8 + $0x168] sm:$0xff] %vm2636, %v2617
    %2683 = vst.msk [vmem:[%s8 + $0x170] sm:$0xff] %vm2636, %v2618
    %2684 = vst.msk [vmem:[%s8 + $0x178] sm:$0xff] %vm2636, %v2619
    %2685 = vst.msk [vmem:[%s8 + $0x180] sm:$0xff] %vm2636, %v2620
    %2686 = vst.msk [vmem:[%s8 + $0x188] sm:$0xff] %vm2636, %v2621
    %2687 = vst.msk [vmem:[%s8 + $0x190] sm:$0xff] %vm2636, %v2622
    %2688 = vst.msk [vmem:[%s8 + $0x198] sm:$0xff] %vm2636, %v2623
    %2689 = vst.msk [vmem:[%s8 + $0x1a0] sm:$0xff] %vm2636, %v2624
    %2690 = vst.msk [vmem:[%s8 + $0x1a8] sm:$0xff] %vm2636, %v2625
    %2691 = vst.msk [vmem:[%s8 + $0x1b0] sm:$0xff] %vm2636, %v2626
    %2692 = vst.msk [vmem:[%s8 + $0x1b8] sm:$0xff] %vm2636, %v2627
    %2693 = vst.msk [vmem:[%s8 + $0x1c0] sm:$0xff] %vm2636, %v2628
    %2694 = vst.msk [vmem:[%s8 + $0x1c8] sm:$0xff] %vm2636, %v2629
    %2695 = vst.msk [vmem:[%s8 + $0x1d0] sm:$0xff] %vm2636, %v2630
    %2696 = vst.msk [vmem:[%s8 + $0x1d8] sm:$0xff] %vm2636, %v2631
    %2697 = vst.msk [vmem:[%s8 + $0x1e0] sm:$0xff] %vm2636, %v2632
    %2698 = vst.msk [vmem:[%s8 + $0x1e8] sm:$0xff] %vm2636, %v2633
    %2699 = vst.msk [vmem:[%s8 + $0x1f0] sm:$0xff] %vm2636, %v2634
    %2700 = vst.msk [vmem:[%s8 + $0x1f8] sm:$0xff] %vm2636, %v2635
    // Predicated region
    $region38: #{tpu_custom_call.1} parent=1 // pred_check
      _
    $region39: #{tpu_custom_call.1} parent=1 // pred_check_branch
      %2702 = sbr.rel (0) target = $region41
    $region40: #{tpu_custom_call.1} parent=1 // pred_region
      _
    $region41: #{tpu_custom_call.1} parent=1 // pred_fallthru
      _
    // Predicated region
    $region42: #{tpu_custom_call.1} parent=1 // pred_check
      _
    $region43: #{tpu_custom_call.1} parent=1 // pred_check_branch
      %2704 = sbr.rel (0) target = $region45
    $region44: #{tpu_custom_call.1} parent=1 // pred_region
      _
    $region45: #{tpu_custom_call.1} parent=1 // pred_fallthru
      _
    %2705 = vsyncpa [#allocation3], 1

</llo_original>
